<compile_context>
chip_gen: v6e
topology: v6e:2x2x1
jax: 0.10.0
libtpu: 0.0.40
codegen_flags: <defaults>
</compile_context>

<pallas_src>
import functools

import jax
import jax.numpy as jnp
from jax.experimental import pallas as pl
from jax.experimental.pallas import tpu as pltpu

NEG_SLOPE = 0.2   # LeakyReLU(negative_slope=0.2)
_H = 128          # halo width: one 128-lane block on each side of the tile


def _leaky_relu(x, slope=NEG_SLOPE):
    return jnp.where(x >= 0, x, slope * x)


def _round_up(x, m):
    return ((x + m - 1) // m) * m


def _residual_stack_kernel(xm_ref, xp_ref, xn_ref, eg_ref, w1_ref, b1_ref,
                           w2_ref, wsk_ref, b2s_ref, o_ref, win_ref, *,
                           K, dilation, pad, tile_t, last_len, nt, mxu_dtype):
    """One (batch, time-tile) grid step. Channels on sublanes, time on lanes."""
    t = pl.program_id(1)

    # ---- Build the activated, reflect-padded window in VMEM scratch --------
    # win covers original time positions [s - 128, s + tile_t + 128), s = t*tile_t.
    xm = xm_ref[0].astype(jnp.float32)                       # (C, tile_t) raw input
    win_ref[:, _H:_H + tile_t] = _leaky_relu(xm)
    win_ref[:, :_H] = _leaky_relu(xp_ref[0].astype(jnp.float32))
    win_ref[:, _H + tile_t:] = _leaky_relu(xn_ref[0].astype(jnp.float32))

    # Reflection fix-ups: only `pad` (<= few) columns, boundary tiles only.
    edges = _leaky_relu(eg_ref[0].astype(jnp.float32))       # (C, 2*pad)

    @pl.when(t == 0)
    def _():   # left reflection: padded positions [-pad, 0)
        win_ref[:, _H - pad:_H] = edges[:, :pad]

    @pl.when(t == nt - 1)
    def _():   # right reflection: original positions [T, T + pad)
        win_ref[:, _H + last_len:_H + last_len + pad] = edges[:, pad:]

    if nt >= 2 and last_len < pad:
        # Last tile shorter than pad: the reflected columns are also read by
        # the second-to-last tile through its right halo section.
        @pl.when(t == nt - 2)
        def _():
            win_ref[:, _H + tile_t + last_len:
                       _H + tile_t + last_len + pad] = edges[:, pad:]

    # ---- Dilated Conv1d(C, C, K): K accumulated (C,C)@(C,tile_t) dots ------
    win = win_ref[...].astype(mxu_dtype)                     # cast once, then slice
    off0 = _H - pad
    acc = jnp.dot(w1_ref[0], win[:, off0:off0 + tile_t],
                  preferred_element_type=jnp.float32)
    for k in range(1, K):
        off = _H - pad + k * dilation
        acc = acc + jnp.dot(w1_ref[k], win[:, off:off + tile_t],
                            preferred_element_type=jnp.float32)

    # ---- LeakyReLU -> stack 1x1 conv + skip 1x1 conv (skip kept f32) -------
    g = _leaky_relu(acc + b1_ref[...])
    out = (jnp.dot(w2_ref[...], g.astype(w2_ref.dtype),
                   preferred_element_type=jnp.float32)
           + jnp.dot(wsk_ref[...], xm, preferred_element_type=jnp.float32)
           + b2s_ref[...])
    o_ref[0] = out.astype(o_ref.dtype)


def residual_stack_forward(x_bct, weight1, bias1, weight2, bias2,
                           weight_skip, bias_skip, *, kernel_size=3,
                           dilation=1, tile_t=4096, mxu_dtype=jnp.bfloat16):
    """Pallas forward. x_bct: (B, C, T) (PyTorch layout). Returns (B, C, T).

    mxu_dtype: dtype of the conv/stack matmul operands (default bf16; the
    accumulation, the skip/residual path and all elementwise math stay f32).
    Pass mxu_dtype=None for full f32 matmuls.
    """
    B, C, T = x_bct.shape
    K = kernel_size
    assert (K - 1) % 2 == 0, "even kernel sizes not supported (matches module)"
    pad = (K - 1) // 2 * dilation
    # TODO(synk): kernel_size=1 (pad == 0) degenerate case not wired up.
    assert 1 <= pad <= _H, "need 1 <= pad <= 128"
    assert pad < T, "reflection padding requires pad < T"

    # Time tiling: lane-aligned tile, at most covering T.
    tile_t = max(_H, (tile_t // _H) * _H)
    TILE_T = min(tile_t, _round_up(T, _H))
    NT = pl.cdiv(T, TILE_T)
    if B * NT < 2 and TILE_T > _H:
        # Give both v7x TensorCores work when there would be a single step.
        TILE_T = max(_H, _round_up(pl.cdiv(T, 2), _H))
        NT = pl.cdiv(T, TILE_T)
    last_len = T - (NT - 1) * TILE_T
    hb = TILE_T // _H                 # tile size in 128-lane blocks
    n128 = pl.cdiv(T, _H)             # number of 128-lane blocks covering T

    w_dtype = jnp.float32 if mxu_dtype is None else mxu_dtype

    # Tiny reflection-edge tensor: [x[pad],...,x[1] | x[T-2],...,x[T-1-pad]].
    left = jnp.flip(x_bct[:, :, 1:pad + 1], axis=2)
    right = jnp.flip(x_bct[:, :, T - 1 - pad:T - 1], axis=2)
    edges = jnp.concatenate([left, right], axis=2)            # (B, C, 2*pad)

    # Weights: torch Conv1d layout (C_out, C_in, K).
    w1r = jnp.transpose(weight1, (2, 0, 1)).astype(w_dtype)   # (K, C, C)
    w2 = weight2[:, :, 0].astype(w_dtype)                     # (C, C) stack 1x1
    wsk = weight_skip[:, :, 0].astype(jnp.float32)            # (C, C) skip stays f32
    b1 = bias1.reshape(C, 1).astype(jnp.float32)
    b2s = (bias2 + bias_skip).reshape(C, 1).astype(jnp.float32)

    kern = functools.partial(
        _residual_stack_kernel, K=K, dilation=dilation, pad=pad, tile_t=TILE_T,
        last_len=last_len, nt=NT, mxu_dtype=w_dtype)

    return pl.pallas_call(
        kern,
        out_shape=jax.ShapeDtypeStruct((B, C, T), x_bct.dtype),
        grid=(B, NT),
        in_specs=[
            # main time tile of the original (unpadded) input
            pl.BlockSpec((1, C, TILE_T), lambda b, t: (b, 0, t)),
            # 128-lane halo ending at the tile start (clamped for t == 0)
            pl.BlockSpec((1, C, _H),
                         lambda b, t: (b, 0, jnp.maximum(t * hb - 1, 0))),
            # 128-lane halo starting at the next tile boundary (clamped at end)
            pl.BlockSpec((1, C, _H),
                         lambda b, t: (b, 0, jnp.minimum((t + 1) * hb, n128 - 1))),
            pl.BlockSpec((1, C, 2 * pad), lambda b, t: (b, 0, 0)),   # reflect edges
            pl.BlockSpec((K, C, C), lambda b, t: (0, 0, 0)),         # dilated-conv taps
            pl.BlockSpec((C, 1), lambda b, t: (0, 0)),               # b1
            pl.BlockSpec((C, C), lambda b, t: (0, 0)),               # stack 1x1 conv
            pl.BlockSpec((C, C), lambda b, t: (0, 0)),               # skip 1x1 conv (f32)
            pl.BlockSpec((C, 1), lambda b, t: (0, 0)),               # b2 + b_skip
        ],
        out_specs=pl.BlockSpec((1, C, TILE_T), lambda b, t: (b, 0, t)),
        scratch_shapes=[pltpu.VMEM((C, TILE_T + 2 * _H), jnp.float32)],
        compiler_params=pltpu.CompilerParams(
            dimension_semantics=("parallel", "parallel"),
            vmem_limit_bytes=32 * 1024 * 1024),
    )(x_bct, x_bct, x_bct, edges, w1r, b1, w2, wsk, b2s)


def _ref_forward(x, w1, b1, w2, b2, ws, bs, *, kernel_size=3, dilation=1):
    """Pure-JAX reference matching the PyTorch module exactly."""
    pad = (kernel_size - 1) // 2 * dilation
    dn = ("NCH", "OIH", "NCH")
    a = _leaky_relu(x)
    a_pad = jnp.pad(a, ((0, 0), (0, 0), (pad, pad)), mode="reflect")
    h = jax.lax.conv_general_dilated(
        a_pad, w1, window_strides=(1,), padding="VALID",
        rhs_dilation=(dilation,), dimension_numbers=dn) + b1[None, :, None]
    h = _leaky_relu(h)
    stack = jax.lax.conv_general_dilated(
        h, w2, (1,), "VALID", dimension_numbers=dn) + b2[None, :, None]
    skip = jax.lax.conv_general_dilated(
        x, ws, (1,), "VALID", dimension_numbers=dn) + bs[None, :, None]
    return stack + skip


if __name__ == "__main__":
    channels = 32
    key = jax.random.PRNGKey(0)

    # (B, T, kernel_size, dilation, tile_t, mxu_dtype, tolerance)
    configs = [
        (2, 16, 3, 1, 4096, None, 2e-4),           # module defaults, tiny T, masked single tile
        (1, 300, 3, 3, 4096, None, 2e-4),          # tile split for megacore, multi-tile halos
        (1, 257, 3, 3, 128, None, 2e-4),           # last tile shorter than pad (reflection corner)
        (2, 200, 3, 1, 128, jnp.bfloat16, 5e-2),   # bf16 MXU operands (default fast path)
    ]

    for (B, T, K, dil, tt, mxu, tol) in configs:
        key, *ks = jax.random.split(key, 8)
        scale = 0.1
        x = jax.random.normal(ks[0], (B, channels, T), jnp.float32)
        # torch Conv1d weight layout: (C_out, C_in, K)
        w1 = scale * jax.random.normal(ks[1], (channels, channels, K), jnp.float32)
        b1 = scale * jax.random.normal(ks[2], (channels,), jnp.float32)
        w2 = scale * jax.random.normal(ks[3], (channels, channels, 1), jnp.float32)
        b2 = scale * jax.random.normal(ks[4], (channels,), jnp.float32)
        wsk = scale * jax.random.normal(ks[5], (channels, channels, 1), jnp.float32)
        bsk = scale * jax.random.normal(ks[6], (channels,), jnp.float32)

        out = residual_stack_forward(
            x, w1, b1, w2, b2, wsk, bsk,
            kernel_size=K, dilation=dil, tile_t=tt, mxu_dtype=mxu)
        out = jax.block_until_ready(out)

        ref = jax.block_until_ready(
            _ref_forward(x, w1, b1, w2, b2, wsk, bsk,
                         kernel_size=K, dilation=dil))

        assert out.shape == (B, channels, T)
        max_err = float(jnp.max(jnp.abs(out - ref)))
        assert jnp.allclose(out, ref, atol=tol, rtol=tol), \
            f"config {(B, T, K, dil, tt, mxu)}: max abs err {max_err}"

    print("KERNEL_OK")
</pallas_src>

<mosaic_0001>
module attributes {stable_mosaic.version = 11 : i64} {
  func.func @_residual_stack_kernel(%arg0: i32, %arg1: i32, %arg2: memref<1x32x128xf32, #tpu.memory_space<vmem>>, %arg3: memref<1x32x128xf32, #tpu.memory_space<vmem>>, %arg4: memref<1x32x128xf32, #tpu.memory_space<vmem>>, %arg5: memref<1x32x2xf32, #tpu.memory_space<vmem>>, %arg6: memref<3x32x32xf32, #tpu.memory_space<vmem>>, %arg7: memref<32x1xf32, #tpu.memory_space<vmem>>, %arg8: memref<32x32xf32, #tpu.memory_space<vmem>>, %arg9: memref<32x32xf32, #tpu.memory_space<vmem>>, %arg10: memref<32x1xf32, #tpu.memory_space<vmem>>, %arg11: memref<1x32x128xf32, #tpu.memory_space<vmem>>, %arg12: memref<32x384xf32, #tpu.memory_space<vmem>>) attributes {dimension_semantics = [#tpu.dimension_semantics<parallel>, #tpu.dimension_semantics<parallel>], iteration_bounds = array<i64: 2, 1>, scalar_prefetch = 0 : i64, scratch_operands = 1 : i64, tpu.core_type = #tpu.core_type<tc>, window_params = [{transform_indices = @transform_0, window_bounds = array<i64: 1, 32, 128>}, {transform_indices = @transform_1, window_bounds = array<i64: 1, 32, 128>}, {transform_indices = @transform_2, window_bounds = array<i64: 1, 32, 128>}, {transform_indices = @transform_3, window_bounds = array<i64: 1, 32, 2>}, {pipeline_mode = #tpu.pipeline_mode<synchronous>, transform_indices = @transform_4, window_bounds = array<i64: 3, 32, 32>}, {pipeline_mode = #tpu.pipeline_mode<synchronous>, transform_indices = @transform_5, window_bounds = array<i64: 32, 1>}, {pipeline_mode = #tpu.pipeline_mode<synchronous>, transform_indices = @transform_6, window_bounds = array<i64: 32, 32>}, {pipeline_mode = #tpu.pipeline_mode<synchronous>, transform_indices = @transform_7, window_bounds = array<i64: 32, 32>}, {pipeline_mode = #tpu.pipeline_mode<synchronous>, transform_indices = @transform_8, window_bounds = array<i64: 32, 1>}, {transform_indices = @transform_9, window_bounds = array<i64: 1, 32, 128>}]} {
    %c0 = arith.constant 0 : index
    %c0_0 = arith.constant 0 : index
    %c0_1 = arith.constant 0 : index
    %0 = vector.load %arg2[%c0, %c0_0, %c0_1] : memref<1x32x128xf32, #tpu.memory_space<vmem>>, vector<1x32x128xf32>
    %1 = vector.shape_cast %0 : vector<1x32x128xf32> to vector<32x128xf32>
    %cst = arith.constant 0.000000e+00 : f32
    %2 = vector.broadcast %cst : f32 to vector<32x128xf32>
    %3 = arith.cmpf oge, %1, %2 : vector<32x128xf32>
    %cst_2 = arith.constant 2.000000e-01 : f32
    %4 = vector.broadcast %cst_2 : f32 to vector<32x128xf32>
    %5 = arith.mulf %4, %1 : vector<32x128xf32>
    %6 = arith.select %3, %1, %5 : vector<32x128xi1>, vector<32x128xf32>
    %c0_3 = arith.constant 0 : index
    %c128 = arith.constant 128 : index
    %7 = vector.load %arg12[%c0_3, %c128] : memref<32x384xf32, #tpu.memory_space<vmem>>, vector<32x128xf32>
    tpu.vector_store %arg12[%c0_3, %c128], %6 {strides = array<i32>} : memref<32x384xf32, #tpu.memory_space<vmem>>, vector<32x128xf32>,
    %c0_4 = arith.constant 0 : index
    %c0_5 = arith.constant 0 : index
    %c0_6 = arith.constant 0 : index
    %8 = vector.load %arg3[%c0_4, %c0_5, %c0_6] : memref<1x32x128xf32, #tpu.memory_space<vmem>>, vector<1x32x128xf32>
    %9 = vector.shape_cast %8 : vector<1x32x128xf32> to vector<32x128xf32>
    %cst_7 = arith.constant 0.000000e+00 : f32
    %10 = vector.broadcast %cst_7 : f32 to vector<32x128xf32>
    %11 = arith.cmpf oge, %9, %10 : vector<32x128xf32>
    %cst_8 = arith.constant 2.000000e-01 : f32
    %12 = vector.broadcast %cst_8 : f32 to vector<32x128xf32>
    %13 = arith.mulf %12, %9 : vector<32x128xf32>
    %14 = arith.select %11, %9, %13 : vector<32x128xi1>, vector<32x128xf32>
    %c0_9 = arith.constant 0 : index
    %c0_10 = arith.constant 0 : index
    %15 = vector.load %arg12[%c0_9, %c0_10] : memref<32x384xf32, #tpu.memory_space<vmem>>, vector<32x128xf32>
    tpu.vector_store %arg12[%c0_9, %c0_10], %14 {strides = array<i32>} : memref<32x384xf32, #tpu.memory_space<vmem>>, vector<32x128xf32>,
    %c0_11 = arith.constant 0 : index
    %c0_12 = arith.constant 0 : index
    %c0_13 = arith.constant 0 : index
    %16 = vector.load %arg4[%c0_11, %c0_12, %c0_13] : memref<1x32x128xf32, #tpu.memory_space<vmem>>, vector<1x32x128xf32>
    %17 = vector.shape_cast %16 : vector<1x32x128xf32> to vector<32x128xf32>
    %cst_14 = arith.constant 0.000000e+00 : f32
    %18 = vector.broadcast %cst_14 : f32 to vector<32x128xf32>
    %19 = arith.cmpf oge, %17, %18 : vector<32x128xf32>
    %cst_15 = arith.constant 2.000000e-01 : f32
    %20 = vector.broadcast %cst_15 : f32 to vector<32x128xf32>
    %21 = arith.mulf %20, %17 : vector<32x128xf32>
    %22 = arith.select %19, %17, %21 : vector<32x128xi1>, vector<32x128xf32>
    %c0_16 = arith.constant 0 : index
    %c256 = arith.constant 256 : index
    %23 = vector.load %arg12[%c0_16, %c256] : memref<32x384xf32, #tpu.memory_space<vmem>>, vector<32x128xf32>
    tpu.vector_store %arg12[%c0_16, %c256], %22 {strides = array<i32>} : memref<32x384xf32, #tpu.memory_space<vmem>>, vector<32x128xf32>,
    %c0_17 = arith.constant 0 : index
    %c0_18 = arith.constant 0 : index
    %c0_19 = arith.constant 0 : index
    %24 = vector.load %arg5[%c0_17, %c0_18, %c0_19] : memref<1x32x2xf32, #tpu.memory_space<vmem>>, vector<1x32x2xf32>
    %25 = vector.shape_cast %24 : vector<1x32x2xf32> to vector<32x2xf32>
    %cst_20 = arith.constant 0.000000e+00 : f32
    %26 = vector.broadcast %cst_20 : f32 to vector<32x2xf32>
    %27 = arith.cmpf oge, %25, %26 : vector<32x2xf32>
    %cst_21 = arith.constant 2.000000e-01 : f32
    %28 = vector.broadcast %cst_21 : f32 to vector<32x2xf32>
    %29 = arith.mulf %28, %25 : vector<32x2xf32>
    %30 = arith.select %27, %25, %29 : vector<32x2xi1>, vector<32x2xf32>
    %c0_i32 = arith.constant 0 : i32
    %31 = arith.cmpi eq, %arg1, %c0_i32 : i32
    %32 = arith.extui %31 : i1 to i32
    %c0_i32_22 = arith.constant 0 : i32
    %33 = arith.cmpi ne, %32, %c0_i32_22 : i32
    scf.if %33 {
      %71 = vector.extract_strided_slice %30 {offsets = [0, 0], sizes = [32, 1], strides = [1, 1]} : vector<32x2xf32> to vector<32x1xf32>
      %c0_52 = arith.constant 0 : index
      %c127 = arith.constant 127 : index
      %72 = vector.load %arg12[%c0_52, %c127] : memref<32x384xf32, #tpu.memory_space<vmem>>, vector<32x1xf32>
      tpu.vector_store %arg12[%c0_52, %c127], %71 {strides = array<i32>} : memref<32x384xf32, #tpu.memory_space<vmem>>, vector<32x1xf32>,
    } else {
    }
    %c0_i32_23 = arith.constant 0 : i32
    %34 = arith.cmpi eq, %arg1, %c0_i32_23 : i32
    %35 = arith.extui %34 : i1 to i32
    %c0_i32_24 = arith.constant 0 : i32
    %36 = arith.cmpi ne, %35, %c0_i32_24 : i32
    scf.if %36 {
      %71 = vector.extract_strided_slice %30 {offsets = [0, 1], sizes = [32, 1], strides = [1, 1]} : vector<32x2xf32> to vector<32x1xf32>
      %c0_52 = arith.constant 0 : index
      %c144 = arith.constant 144 : index
      %72 = vector.load %arg12[%c0_52, %c144] : memref<32x384xf32, #tpu.memory_space<vmem>>, vector<32x1xf32>
      tpu.vector_store %arg12[%c0_52, %c144], %71 {strides = array<i32>} : memref<32x384xf32, #tpu.memory_space<vmem>>, vector<32x1xf32>,
    } else {
    }
    %c0_25 = arith.constant 0 : index
    %c0_26 = arith.constant 0 : index
    %37 = vector.load %arg12[%c0_25, %c0_26] : memref<32x384xf32, #tpu.memory_space<vmem>>, vector<32x384xf32>
    %c0_27 = arith.constant 0 : index
    %c0_28 = arith.constant 0 : index
    %c0_29 = arith.constant 0 : index
    %38 = vector.load %arg6[%c0_27, %c0_28, %c0_29] : memref<3x32x32xf32, #tpu.memory_space<vmem>>, vector<1x32x32xf32>
    %39 = vector.shape_cast %38 : vector<1x32x32xf32> to vector<32x32xf32>
    %40 = vector.extract_strided_slice %37 {offsets = [0, 127], sizes = [32, 128], strides = [1, 1]} : vector<32x384xf32> to vector<32x128xf32>
    %cst_30 = arith.constant dense<0.000000e+00> : vector<32x128xf32>
    %41 = tpu.matmul %39, %40, %cst_30 {dimension_numbers = #tpu.dot_dimension_numbers<[1], [0], [0], [1], [0, 0, 1, 1], [], []>} : vector<32x32xf32>, vector<32x128xf32>, vector<32x128xf32> -> vector<32x128xf32>
    %c1 = arith.constant 1 : index
    %c0_31 = arith.constant 0 : index
    %c0_32 = arith.constant 0 : index
    %42 = vector.load %arg6[%c1, %c0_31, %c0_32] : memref<3x32x32xf32, #tpu.memory_space<vmem>>, vector<1x32x32xf32>
    %43 = vector.shape_cast %42 : vector<1x32x32xf32> to vector<32x32xf32>
    %44 = vector.extract_strided_slice %37 {offsets = [0, 128], sizes = [32, 128], strides = [1, 1]} : vector<32x384xf32> to vector<32x128xf32>
    %cst_33 = arith.constant dense<0.000000e+00> : vector<32x128xf32>
    %45 = tpu.matmul %43, %44, %cst_33 {dimension_numbers = #tpu.dot_dimension_numbers<[1], [0], [0], [1], [0, 0, 1, 1], [], []>} : vector<32x32xf32>, vector<32x128xf32>, vector<32x128xf32> -> vector<32x128xf32>
    %46 = arith.addf %41, %45 : vector<32x128xf32>
    %c2 = arith.constant 2 : index
    %c0_34 = arith.constant 0 : index
    %c0_35 = arith.constant 0 : index
    %47 = vector.load %arg6[%c2, %c0_34, %c0_35] : memref<3x32x32xf32, #tpu.memory_space<vmem>>, vector<1x32x32xf32>
    %48 = vector.shape_cast %47 : vector<1x32x32xf32> to vector<32x32xf32>
    %49 = vector.extract_strided_slice %37 {offsets = [0, 129], sizes = [32, 128], strides = [1, 1]} : vector<32x384xf32> to vector<32x128xf32>
    %cst_36 = arith.constant dense<0.000000e+00> : vector<32x128xf32>
    %50 = tpu.matmul %48, %49, %cst_36 {dimension_numbers = #tpu.dot_dimension_numbers<[1], [0], [0], [1], [0, 0, 1, 1], [], []>} : vector<32x32xf32>, vector<32x128xf32>, vector<32x128xf32> -> vector<32x128xf32>
    %51 = arith.addf %46, %50 : vector<32x128xf32>
    %c0_37 = arith.constant 0 : index
    %c0_38 = arith.constant 0 : index
    %52 = vector.load %arg7[%c0_37, %c0_38] : memref<32x1xf32, #tpu.memory_space<vmem>>, vector<32x1xf32>
    %53 = vector.broadcast %52 : vector<32x1xf32> to vector<32x128xf32>
    %54 = arith.addf %51, %53 : vector<32x128xf32>
    %cst_39 = arith.constant 0.000000e+00 : f32
    %55 = vector.broadcast %cst_39 : f32 to vector<32x128xf32>
    %56 = arith.cmpf oge, %54, %55 : vector<32x128xf32>
    %cst_40 = arith.constant 2.000000e-01 : f32
    %57 = vector.broadcast %cst_40 : f32 to vector<32x128xf32>
    %58 = arith.mulf %57, %54 : vector<32x128xf32>
    %59 = arith.select %56, %54, %58 : vector<32x128xi1>, vector<32x128xf32>
    %c0_41 = arith.constant 0 : index
    %c0_42 = arith.constant 0 : index
    %60 = vector.load %arg8[%c0_41, %c0_42] : memref<32x32xf32, #tpu.memory_space<vmem>>, vector<32x32xf32>
    %cst_43 = arith.constant dense<0.000000e+00> : vector<32x128xf32>
    %61 = tpu.matmul %60, %59, %cst_43 {dimension_numbers = #tpu.dot_dimension_numbers<[1], [0], [0], [1], [0, 0, 1, 1], [], []>} : vector<32x32xf32>, vector<32x128xf32>, vector<32x128xf32> -> vector<32x128xf32>
    %c0_44 = arith.constant 0 : index
    %c0_45 = arith.constant 0 : index
    %62 = vector.load %arg9[%c0_44, %c0_45] : memref<32x32xf32, #tpu.memory_space<vmem>>, vector<32x32xf32>
    %cst_46 = arith.constant dense<0.000000e+00> : vector<32x128xf32>
    %63 = tpu.matmul %62, %1, %cst_46 {dimension_numbers = #tpu.dot_dimension_numbers<[1], [0], [0], [1], [0, 0, 1, 1], [], []>} : vector<32x32xf32>, vector<32x128xf32>, vector<32x128xf32> -> vector<32x128xf32>
    %64 = arith.addf %61, %63 : vector<32x128xf32>
    %c0_47 = arith.constant 0 : index
    %c0_48 = arith.constant 0 : index
    %65 = vector.load %arg10[%c0_47, %c0_48] : memref<32x1xf32, #tpu.memory_space<vmem>>, vector<32x1xf32>
    %66 = vector.broadcast %65 : vector<32x1xf32> to vector<32x128xf32>
    %67 = arith.addf %64, %66 : vector<32x128xf32>
    %c0_49 = arith.constant 0 : index
    %c0_50 = arith.constant 0 : index
    %c0_51 = arith.constant 0 : index
    %68 = vector.load %arg11[%c0_49, %c0_50, %c0_51] : memref<1x32x128xf32, #tpu.memory_space<vmem>>, vector<1x32x128xf32>
    %69 = vector.shape_cast %68 : vector<1x32x128xf32> to vector<32x128xf32>
    %70 = vector.shape_cast %67 : vector<32x128xf32> to vector<1x32x128xf32>
    tpu.vector_store %arg11[%c0_49, %c0_50, %c0_51], %70 {strides = array<i32>} : memref<1x32x128xf32, #tpu.memory_space<vmem>>, vector<1x32x128xf32>,
    return
  }
  func.func @transform_0(%arg0: i32, %arg1: i32) -> (i32, i32, i32) {
    %c0_i32 = arith.constant 0 : i32
    %c0_i32_0 = arith.constant 0 : i32
    return %arg0, %c0_i32, %arg1 : i32, i32, i32
  }
  func.func @transform_1(%arg0: i32, %arg1: i32) -> (i32, i32, i32) {
    %c1_i32 = arith.constant 1 : i32
    %0 = arith.muli %arg1, %c1_i32 : i32
    %c1_i32_0 = arith.constant 1 : i32
    %1 = arith.subi %0, %c1_i32_0 : i32
    %c0_i32 = arith.constant 0 : i32
    %2 = arith.maxsi %1, %c0_i32 : i32
    %c0_i32_1 = arith.constant 0 : i32
    %c0_i32_2 = arith.constant 0 : i32
    return %arg0, %c0_i32_1, %2 : i32, i32, i32
  }
  func.func @transform_2(%arg0: i32, %arg1: i32) -> (i32, i32, i32) {
    %c1_i32 = arith.constant 1 : i32
    %0 = arith.addi %arg1, %c1_i32 : i32
    %c1_i32_0 = arith.constant 1 : i32
    %1 = arith.muli %0, %c1_i32_0 : i32
    %c0_i32 = arith.constant 0 : i32
    %2 = arith.minsi %1, %c0_i32 : i32
    %c0_i32_1 = arith.constant 0 : i32
    %c0_i32_2 = arith.constant 0 : i32
    return %arg0, %c0_i32_1, %2 : i32, i32, i32
  }
  func.func @transform_3(%arg0: i32, %arg1: i32) -> (i32, i32, i32) {
    %c0_i32 = arith.constant 0 : i32
    %c0_i32_0 = arith.constant 0 : i32
    %c0_i32_1 = arith.constant 0 : i32
    return %arg0, %c0_i32, %c0_i32_0 : i32, i32, i32
  }
  func.func @transform_4(%arg0: i32, %arg1: i32) -> (i32, i32, i32) {
    %c0_i32 = arith.constant 0 : i32
    %c0_i32_0 = arith.constant 0 : i32
    %c0_i32_1 = arith.constant 0 : i32
    %c0_i32_2 = arith.constant 0 : i32
    return %c0_i32, %c0_i32_0, %c0_i32_1 : i32, i32, i32
  }
  func.func @transform_5(%arg0: i32, %arg1: i32) -> (i32, i32) {
    %c0_i32 = arith.constant 0 : i32
    %c0_i32_0 = arith.constant 0 : i32
    %c0_i32_1 = arith.constant 0 : i32
    return %c0_i32, %c0_i32_0 : i32, i32
  }
  func.func @transform_6(%arg0: i32, %arg1: i32) -> (i32, i32) {
    %c0_i32 = arith.constant 0 : i32
    %c0_i32_0 = arith.constant 0 : i32
    %c0_i32_1 = arith.constant 0 : i32
    return %c0_i32, %c0_i32_0 : i32, i32
  }
  func.func @transform_7(%arg0: i32, %arg1: i32) -> (i32, i32) {
    %c0_i32 = arith.constant 0 : i32
    %c0_i32_0 = arith.constant 0 : i32
    %c0_i32_1 = arith.constant 0 : i32
    return %c0_i32, %c0_i32_0 : i32, i32
  }
  func.func @transform_8(%arg0: i32, %arg1: i32) -> (i32, i32) {
    %c0_i32 = arith.constant 0 : i32
    %c0_i32_0 = arith.constant 0 : i32
    %c0_i32_1 = arith.constant 0 : i32
    return %c0_i32, %c0_i32_0 : i32, i32
  }
  func.func @transform_9(%arg0: i32, %arg1: i32) -> (i32, i32, i32) {
    %c0_i32 = arith.constant 0 : i32
    %c0_i32_0 = arith.constant 0 : i32
    return %arg0, %c0_i32, %arg1 : i32, i32, i32
  }
}

</mosaic_0001>

<llo_original>
// kernel: tpu_custom_call.1
$region0: #{tpu_custom_call.1}
  #allocation0 [shape = 'u32[]', space=smem, size = 0x4, offset = 0x4, fixed_abs, tag = 'smem constant byte address 0x4 - core index']
  #allocation1 [shape = 'u32[144,128]{1,0:T(1,128)}', space=vmem, size = 0x12000, scoped, tag = 'internal scratch']
  #allocation2 [shape = 'f32[32,384]{1,0:T(8,128)}', space=vmem, size = 0xc000, scoped, tag = 'scratch operand']
  %s0 = inlined_call_operand.vmem [shape: f32[2,32,16], index: 0, kind: input, shape index: {}]
  %s1 = inlined_call_operand.vmem [shape: f32[2,32,16], index: 1, kind: input, shape index: {}]
  %s2 = inlined_call_operand.vmem [shape: f32[2,32,16], index: 2, kind: input, shape index: {}]
  %s3 = inlined_call_operand.vmem [shape: f32[2,32,2], index: 3, kind: input, shape index: {}]
  %s4 = inlined_call_operand.vmem [shape: f32[3,32,32], index: 4, kind: input, shape index: {}]
  %s5 = inlined_call_operand.vmem [shape: f32[32,1], index: 5, kind: input, shape index: {}]
  %s6 = inlined_call_operand.vmem [shape: f32[32,32], index: 6, kind: input, shape index: {}]
  %s7 = inlined_call_operand.vmem [shape: f32[32,32], index: 7, kind: input, shape index: {}]
  %s8 = inlined_call_operand.vmem [shape: f32[32,1], index: 8, kind: input, shape index: {}]
  %s9 = inlined_call_operand.vmem [shape: f32[2,32,16], index: 9, kind: output, shape index: {}]
  %s10 = sld [smem:[#allocation0]]
  $region73: #{tpu_custom_call.1} parent=0
    _
  %s12 = ssub.s32 1, %s10
  %s13 = scalar_select 0, %s12, %s10
  loop: start=0, step=1, limit=4
  $region2: #{tpu_custom_call.1} parent=0 // loop_pre_header
    _
  $region3: #{tpu_custom_call.1} parent=0 // loop_header
    %s15 = sphi 0, %s19
    %p16 = scmp.ge.s32.totalorder %s15, 4
    %s22 = sphi 0, %s34
    %s23 = sphi 0, %s30
    %s24 = sphi 0, %s22
    %s25 = sphi 0, %s23
    %s26 = sphi 0, %s24
    %s27 = sphi 0, %s25
    %s39 = sphi 0, %s41
    %s42 = sphi 0, %s39
    %s43 = sphi 0, %s42
    %s59 = sphi 0, %s43
    %s73 = sphi 0, %s75
    %s76 = sphi 0, %s73
    %s77 = sphi 0, %s76
    %s93 = sphi 0, %s77
    %s107 = sphi 0, %s109
    %s110 = sphi 0, %s107
    %s111 = sphi 0, %s110
    %s127 = sphi 0, %s111
    %s133 = sphi 0, %s135
    %s136 = sphi 0, %s133
    %s137 = sphi 0, %s136
    %s153 = sphi 0, %s137
    %s157 = sphi 0, %s157
    %s159 = sphi 0, %s157
    %s160 = sphi 0, %s159
    %s174 = sphi 0, %s160
    %s178 = sphi 0, %s178
    %s180 = sphi 0, %s178
    %s181 = sphi 0, %s180
    %s195 = sphi 0, %s181
    %s199 = sphi 0, %s199
    %s201 = sphi 0, %s199
    %s202 = sphi 0, %s201
    %s216 = sphi 0, %s202
    %s220 = sphi 0, %s220
    %s222 = sphi 0, %s220
    %s223 = sphi 0, %s222
    %s237 = sphi 0, %s223
    %s241 = sphi 0, %s241
    %s243 = sphi 0, %s241
    %s244 = sphi 0, %s243
    %s258 = sphi 0, %s244
    %s266 = sphi 0, %s268
    %s269 = sphi 0, %s266
    %s270 = sphi 0, %s269
    %s286 = sphi 0, %s270
  $region4: #{tpu_custom_call.1} parent=0 // loop_header_branch
    %18 = sbr.rel (%p16) target = $region8
  $region5: #{tpu_custom_call.1} parent=0 // loop_body
    %s20 = ssub.s32 %s15, 1
    %s21 = ssub.s32 %s15, 2
    %s28 = sadd.s32 1, %s23
    %p29 = scmp.ge.s32.totalorder %s28, 1
    %s30 = scalar_select %p29, 0, %s28
    %s31 = sadd.s32 1, %s22
    %s32 = scalar_select %p29, %s31, %s22
    %p33 = scmp.ge.s32.totalorder %s32, 2
    %s34 = scalar_select %p33, 0, %s32
    %s35 = ssub.s32 %s22, %s34
    %s36 = ssub.s32 %s23, %s30
    %s37 = sor.u32 %s35, %s36
    %p38 = scmp.eq.s32.totalorder %s37, 0
    %s40 = sadd.s32 %s39, 1
    %s41 = scalar_select %p38, %s39, %s40
    %p44 = pneg %p38
    %p45 = scmp.eq.s32.totalorder %s15, 1
    %p46 = por %p44, %p45
    %p47 = scmp.ne.s32.totalorder %s39, %s42
    %p48 = scmp.eq.s32.totalorder %s15, 0
    %p49 = por %p47, %p48
    %p50 = scmp.ne.s32.totalorder %s39, %s42
    %p51 = scmp.eq.s32.totalorder %s20, 1
    %p52 = por %p50, %p51
    %p53 = scmp.ne.s32.totalorder %s42, %s43
    %p54 = scmp.eq.s32.totalorder %s20, 0
    %p55 = por %p53, %p54
    %p56 = scmp.ne.s32.totalorder %s42, %s43
    %p57 = scmp.eq.s32.totalorder %s21, 1
    %p58 = por %p56, %p57
    %p60 = scmp.ne.s32.totalorder %s43, %s59
    %p61 = scmp.eq.s32.totalorder %s21, 0
    %p62 = por %p60, %p61
    %s63 = ssub.s32 %s23, 1
    %p64 = scmp.gt.s32.totalorder %s63, 0
    %s65 = scalar_select %p64, %s63, 0
    %s66 = ssub.s32 %s30, 1
    %p67 = scmp.gt.s32.totalorder %s66, 0
    %s68 = scalar_select %p67, %s66, 0
    %s69 = ssub.s32 %s22, %s34
    %s70 = ssub.s32 %s65, %s68
    %s71 = sor.u32 %s69, %s70
    %p72 = scmp.eq.s32.totalorder %s71, 0
    %s74 = sadd.s32 %s73, 1
    %s75 = scalar_select %p72, %s73, %s74
    %p78 = pneg %p72
    %p79 = scmp.eq.s32.totalorder %s15, 1
    %p80 = por %p78, %p79
    %p81 = scmp.ne.s32.totalorder %s73, %s76
    %p82 = scmp.eq.s32.totalorder %s15, 0
    %p83 = por %p81, %p82
    %p84 = scmp.ne.s32.totalorder %s73, %s76
    %p85 = scmp.eq.s32.totalorder %s20, 1
    %p86 = por %p84, %p85
    %p87 = scmp.ne.s32.totalorder %s76, %s77
    %p88 = scmp.eq.s32.totalorder %s20, 0
    %p89 = por %p87, %p88
    %p90 = scmp.ne.s32.totalorder %s76, %s77
    %p91 = scmp.eq.s32.totalorder %s21, 1
    %p92 = por %p90, %p91
    %p94 = scmp.ne.s32.totalorder %s77, %s93
    %p95 = scmp.eq.s32.totalorder %s21, 0
    %p96 = por %p94, %p95
    %s97 = sadd.s32 %s23, 1
    %p98 = scmp.lt.s32.totalorder %s97, 0
    %s99 = scalar_select %p98, %s97, 0
    %s100 = sadd.s32 %s30, 1
    %p101 = scmp.lt.s32.totalorder %s100, 0
    %s102 = scalar_select %p101, %s100, 0
    %s103 = ssub.s32 %s22, %s34
    %s104 = ssub.s32 %s99, %s102
    %s105 = sor.u32 %s103, %s104
    %p106 = scmp.eq.s32.totalorder %s105, 0
    %s108 = sadd.s32 %s107, 1
    %s109 = scalar_select %p106, %s107, %s108
    %p112 = pneg %p106
    %p113 = scmp.eq.s32.totalorder %s15, 1
    %p114 = por %p112, %p113
    %p115 = scmp.ne.s32.totalorder %s107, %s110
    %p116 = scmp.eq.s32.totalorder %s15, 0
    %p117 = por %p115, %p116
    %p118 = scmp.ne.s32.totalorder %s107, %s110
    %p119 = scmp.eq.s32.totalorder %s20, 1
    %p120 = por %p118, %p119
    %p121 = scmp.ne.s32.totalorder %s110, %s111
    %p122 = scmp.eq.s32.totalorder %s20, 0
    %p123 = por %p121, %p122
    %p124 = scmp.ne.s32.totalorder %s110, %s111
    %p125 = scmp.eq.s32.totalorder %s21, 1
    %p126 = por %p124, %p125
    %p128 = scmp.ne.s32.totalorder %s111, %s127
    %p129 = scmp.eq.s32.totalorder %s21, 0
    %p130 = por %p128, %p129
    %s131 = ssub.s32 %s22, %s34
    %p132 = scmp.eq.s32.totalorder %s131, 0
    %s134 = sadd.s32 %s133, 1
    %s135 = scalar_select %p132, %s133, %s134
    %p138 = pneg %p132
    %p139 = scmp.eq.s32.totalorder %s15, 1
    %p140 = por %p138, %p139
    %p141 = scmp.ne.s32.totalorder %s133, %s136
    %p142 = scmp.eq.s32.totalorder %s15, 0
    %p143 = por %p141, %p142
    %p144 = scmp.ne.s32.totalorder %s133, %s136
    %p145 = scmp.eq.s32.totalorder %s20, 1
    %p146 = por %p144, %p145
    %p147 = scmp.ne.s32.totalorder %s136, %s137
    %p148 = scmp.eq.s32.totalorder %s20, 0
    %p149 = por %p147, %p148
    %p150 = scmp.ne.s32.totalorder %s136, %s137
    %p151 = scmp.eq.s32.totalorder %s21, 1
    %p152 = por %p150, %p151
    %p154 = scmp.ne.s32.totalorder %s137, %s153
    %p155 = scmp.eq.s32.totalorder %s21, 0
    %p156 = por %p154, %p155
    %s158 = sadd.s32 %s157, 1
    %p161 = scmp.eq.s32.totalorder %s15, 1
    %p162 = scmp.ne.s32.totalorder %s157, %s159
    %p163 = scmp.eq.s32.totalorder %s15, 0
    %p164 = por %p162, %p163
    %p165 = scmp.ne.s32.totalorder %s157, %s159
    %p166 = scmp.eq.s32.totalorder %s20, 1
    %p167 = por %p165, %p166
    %p168 = scmp.ne.s32.totalorder %s159, %s160
    %p169 = scmp.eq.s32.totalorder %s20, 0
    %p170 = por %p168, %p169
    %p171 = scmp.ne.s32.totalorder %s159, %s160
    %p172 = scmp.eq.s32.totalorder %s21, 1
    %p173 = por %p171, %p172
    %p175 = scmp.ne.s32.totalorder %s160, %s174
    %p176 = scmp.eq.s32.totalorder %s21, 0
    %p177 = por %p175, %p176
    %s179 = sadd.s32 %s178, 1
    %p182 = scmp.eq.s32.totalorder %s15, 1
    %p183 = scmp.ne.s32.totalorder %s178, %s180
    %p184 = scmp.eq.s32.totalorder %s15, 0
    %p185 = por %p183, %p184
    %p186 = scmp.ne.s32.totalorder %s178, %s180
    %p187 = scmp.eq.s32.totalorder %s20, 1
    %p188 = por %p186, %p187
    %p189 = scmp.ne.s32.totalorder %s180, %s181
    %p190 = scmp.eq.s32.totalorder %s20, 0
    %p191 = por %p189, %p190
    %p192 = scmp.ne.s32.totalorder %s180, %s181
    %p193 = scmp.eq.s32.totalorder %s21, 1
    %p194 = por %p192, %p193
    %p196 = scmp.ne.s32.totalorder %s181, %s195
    %p197 = scmp.eq.s32.totalorder %s21, 0
    %p198 = por %p196, %p197
    %s200 = sadd.s32 %s199, 1
    %p203 = scmp.eq.s32.totalorder %s15, 1
    %p204 = scmp.ne.s32.totalorder %s199, %s201
    %p205 = scmp.eq.s32.totalorder %s15, 0
    %p206 = por %p204, %p205
    %p207 = scmp.ne.s32.totalorder %s199, %s201
    %p208 = scmp.eq.s32.totalorder %s20, 1
    %p209 = por %p207, %p208
    %p210 = scmp.ne.s32.totalorder %s201, %s202
    %p211 = scmp.eq.s32.totalorder %s20, 0
    %p212 = por %p210, %p211
    %p213 = scmp.ne.s32.totalorder %s201, %s202
    %p214 = scmp.eq.s32.totalorder %s21, 1
    %p215 = por %p213, %p214
    %p217 = scmp.ne.s32.totalorder %s202, %s216
    %p218 = scmp.eq.s32.totalorder %s21, 0
    %p219 = por %p217, %p218
    %s221 = sadd.s32 %s220, 1
    %p224 = scmp.eq.s32.totalorder %s15, 1
    %p225 = scmp.ne.s32.totalorder %s220, %s222
    %p226 = scmp.eq.s32.totalorder %s15, 0
    %p227 = por %p225, %p226
    %p228 = scmp.ne.s32.totalorder %s220, %s222
    %p229 = scmp.eq.s32.totalorder %s20, 1
    %p230 = por %p228, %p229
    %p231 = scmp.ne.s32.totalorder %s222, %s223
    %p232 = scmp.eq.s32.totalorder %s20, 0
    %p233 = por %p231, %p232
    %p234 = scmp.ne.s32.totalorder %s222, %s223
    %p235 = scmp.eq.s32.totalorder %s21, 1
    %p236 = por %p234, %p235
    %p238 = scmp.ne.s32.totalorder %s223, %s237
    %p239 = scmp.eq.s32.totalorder %s21, 0
    %p240 = por %p238, %p239
    %s242 = sadd.s32 %s241, 1
    %p245 = scmp.eq.s32.totalorder %s15, 1
    %p246 = scmp.ne.s32.totalorder %s241, %s243
    %p247 = scmp.eq.s32.totalorder %s15, 0
    %p248 = por %p246, %p247
    %p249 = scmp.ne.s32.totalorder %s241, %s243
    %p250 = scmp.eq.s32.totalorder %s20, 1
    %p251 = por %p249, %p250
    %p252 = scmp.ne.s32.totalorder %s243, %s244
    %p253 = scmp.eq.s32.totalorder %s20, 0
    %p254 = por %p252, %p253
    %p255 = scmp.ne.s32.totalorder %s243, %s244
    %p256 = scmp.eq.s32.totalorder %s21, 1
    %p257 = por %p255, %p256
    %p259 = scmp.ne.s32.totalorder %s244, %s258
    %p260 = scmp.eq.s32.totalorder %s21, 0
    %p261 = por %p259, %p260
    %s262 = ssub.s32 %s22, %s34
    %s263 = ssub.s32 %s23, %s30
    %s264 = sor.u32 %s262, %s263
    %p265 = scmp.eq.s32.totalorder %s264, 0
    %s267 = sadd.s32 %s266, 1
    %s268 = scalar_select %p265, %s266, %s267
    %p271 = pneg %p265
    %p272 = scmp.eq.s32.totalorder %s15, 1
    %p273 = por %p271, %p272
    %p274 = scmp.ne.s32.totalorder %s266, %s269
    %p275 = scmp.eq.s32.totalorder %s15, 0
    %p276 = por %p274, %p275
    %p277 = scmp.ne.s32.totalorder %s266, %s269
    %p278 = scmp.eq.s32.totalorder %s20, 1
    %p279 = por %p277, %p278
    %p280 = scmp.ne.s32.totalorder %s269, %s270
    %p281 = scmp.eq.s32.totalorder %s20, 0
    %p282 = por %p280, %p281
    %p283 = scmp.ne.s32.totalorder %s269, %s270
    %p284 = scmp.eq.s32.totalorder %s21, 1
    %p285 = por %p283, %p284
    %p287 = scmp.ne.s32.totalorder %s270, %s286
    %p288 = scmp.eq.s32.totalorder %s21, 0
    %p289 = por %p287, %p288
    %p290 = scmp.le.s32.totalorder 1, %s15
    %p291 = scmp.lt.s32.totalorder %s15, 3
    %p292 = pnand %p290, %p291
    %p293 = pneg %p292
    // Predicated region
    $region9: #{tpu_custom_call.1} parent=5 // pred_check
      _
    $region10: #{tpu_custom_call.1} parent=5 // pred_check_branch
      %295 = sbr.rel (%p292) target = $region12
    $region11: #{tpu_custom_call.1} parent=5 // pred_region
      %s296 = ssub.s32 %s15, 1
      // Predicated region
      $region13: #{tpu_custom_call.1} parent=11 // pred_check
        %p297 = pneg %p170
      $region14: #{tpu_custom_call.1} parent=11 // pred_check_branch
        %299 = sbr.rel (%p297) target = $region16
      $region15: #{tpu_custom_call.1} parent=11 // pred_region
        _
      $region16: #{tpu_custom_call.1} parent=11 // pred_fallthru
        _
      // Predicated region
      $region17: #{tpu_custom_call.1} parent=11 // pred_check
        %p300 = pneg %p191
      $region18: #{tpu_custom_call.1} parent=11 // pred_check_branch
        %302 = sbr.rel (%p300) target = $region20
      $region19: #{tpu_custom_call.1} parent=11 // pred_region
        _
      $region20: #{tpu_custom_call.1} parent=11 // pred_fallthru
        _
      // Predicated region
      $region21: #{tpu_custom_call.1} parent=11 // pred_check
        %p303 = pneg %p212
      $region22: #{tpu_custom_call.1} parent=11 // pred_check_branch
        %305 = sbr.rel (%p303) target = $region24
      $region23: #{tpu_custom_call.1} parent=11 // pred_region
        _
      $region24: #{tpu_custom_call.1} parent=11 // pred_fallthru
        _
      // Predicated region
      $region25: #{tpu_custom_call.1} parent=11 // pred_check
        %p306 = pneg %p233
      $region26: #{tpu_custom_call.1} parent=11 // pred_check_branch
        %308 = sbr.rel (%p306) target = $region28
      $region27: #{tpu_custom_call.1} parent=11 // pred_region
        _
      $region28: #{tpu_custom_call.1} parent=11 // pred_fallthru
        _
      // Predicated region
      $region29: #{tpu_custom_call.1} parent=11 // pred_check
        %p309 = pneg %p254
      $region30: #{tpu_custom_call.1} parent=11 // pred_check_branch
        %311 = sbr.rel (%p309) target = $region32
      $region31: #{tpu_custom_call.1} parent=11 // pred_region
        _
      $region32: #{tpu_custom_call.1} parent=11 // pred_fallthru
        _
    $region12: #{tpu_custom_call.1} parent=5 // pred_fallthru
      _
    %p312 = scmp.lt.s32.totalorder %s15, 2
    // Predicated region
    $region33: #{tpu_custom_call.1} parent=5 // pred_check
      %p313 = pneg %p312
    $region34: #{tpu_custom_call.1} parent=5 // pred_check_branch
      %315 = sbr.rel (%p313) target = $region36
    $region35: #{tpu_custom_call.1} parent=5 // pred_region
      // Predicated region
      $region37: #{tpu_custom_call.1} parent=35 // pred_check
        %p316 = pneg %p49
      $region38: #{tpu_custom_call.1} parent=35 // pred_check_branch
        %318 = sbr.rel (%p316) target = $region40
      $region39: #{tpu_custom_call.1} parent=35 // pred_region
        %p319 = scmp.lt.s32.totalorder %s22, 1
        %s320 = scalar_select %p319, %s22, 1
        %p321 = scmp.lt.s32.totalorder %s23, 0
        %s322 = scalar_select %p321, %s23, 0
        %s323 = smul.addr %s320, 4
        %s324 = sadd.s32 %s322, %s323
        %s325 = smul.addr %s324, 8
        %s326 = scalar_lea.vmem %s0, %s325
      $region40: #{tpu_custom_call.1} parent=35 // pred_fallthru
        _
      // Predicated region
      $region41: #{tpu_custom_call.1} parent=35 // pred_check
        %p327 = pneg %p83
      $region42: #{tpu_custom_call.1} parent=35 // pred_check_branch
        %329 = sbr.rel (%p327) target = $region44
      $region43: #{tpu_custom_call.1} parent=35 // pred_region
        %s330 = ssub.s32 %s23, 1
        %p331 = scmp.gt.s32.totalorder %s330, 0
        %s332 = scalar_select %p331, %s330, 0
        %p333 = scmp.lt.s32.totalorder %s22, 1
        %s334 = scalar_select %p333, %s22, 1
        %p335 = scmp.lt.s32.totalorder %s332, 0
        %s336 = scalar_select %p335, %s332, 0
        %s337 = smul.addr %s334, 4
        %s338 = sadd.s32 %s336, %s337
        %s339 = smul.addr %s338, 8
        %s340 = scalar_lea.vmem %s1, %s339
        %s341 = ssub.s32 %s23, 1
        %p342 = scmp.gt.s32.totalorder %s341, 0
        %s343 = scalar_select %p342, %s341, 0
      $region44: #{tpu_custom_call.1} parent=35 // pred_fallthru
        _
      // Predicated region
      $region45: #{tpu_custom_call.1} parent=35 // pred_check
        %p344 = pneg %p117
      $region46: #{tpu_custom_call.1} parent=35 // pred_check_branch
        %346 = sbr.rel (%p344) target = $region48
      $region47: #{tpu_custom_call.1} parent=35 // pred_region
        %s347 = sadd.s32 %s23, 1
        %p348 = scmp.lt.s32.totalorder %s347, 0
        %s349 = scalar_select %p348, %s347, 0
        %p350 = scmp.lt.s32.totalorder %s22, 1
        %s351 = scalar_select %p350, %s22, 1
        %p352 = scmp.lt.s32.totalorder %s349, 0
        %s353 = scalar_select %p352, %s349, 0
        %s354 = smul.addr %s351, 4
        %s355 = sadd.s32 %s353, %s354
        %s356 = smul.addr %s355, 8
        %s357 = scalar_lea.vmem %s2, %s356
        %s358 = sadd.s32 %s23, 1
        %p359 = scmp.lt.s32.totalorder %s358, 0
        %s360 = scalar_select %p359, %s358, 0
      $region48: #{tpu_custom_call.1} parent=35 // pred_fallthru
        _
      // Predicated region
      $region49: #{tpu_custom_call.1} parent=35 // pred_check
        %p361 = pneg %p143
      $region50: #{tpu_custom_call.1} parent=35 // pred_check_branch
        %363 = sbr.rel (%p361) target = $region52
      $region51: #{tpu_custom_call.1} parent=35 // pred_region
        %p364 = scmp.lt.s32.totalorder %s22, 1
        %s365 = scalar_select %p364, %s22, 1
        %s366 = smul.addr %s365, 4
        %s367 = smul.addr %s366, 8
        %s368 = scalar_lea.vmem %s3, %s367
      $region52: #{tpu_custom_call.1} parent=35 // pred_fallthru
        _
    $region36: #{tpu_custom_call.1} parent=5 // pred_fallthru
      _
    %p369 = scmp.le.s32.totalorder 1, %s15
    %p370 = scmp.lt.s32.totalorder %s15, 3
    %p371 = pnand %p369, %p370
    %p372 = pneg %p371
    // Predicated region
    $region53: #{tpu_custom_call.1} parent=5 // pred_check
      _
    $region54: #{tpu_custom_call.1} parent=5 // pred_check_branch
      %374 = sbr.rel (%p371) target = $region56
    $region55: #{tpu_custom_call.1} parent=5 // pred_region
      %s375 = ssub.s32 %s15, 1
      %p376 = scmp.lt.s32.totalorder %s24, 1
      %s377 = scalar_select %p376, %s24, 1
      %p378 = scmp.lt.s32.totalorder %s25, 0
      %s379 = scalar_select %p378, %s25, 0
      %s380 = smul.addr %s377, 4
      %s381 = sadd.s32 %s379, %s380
      %s382 = smul.addr %s381, 8
      %s383 = scalar_lea.vmem %s0, %s382
      %p384 = pneg %p55
      %p385 = pneg %p52
      %s386 = ssub.s32 %s25, 1
      %p387 = scmp.gt.s32.totalorder %s386, 0
      %s388 = scalar_select %p387, %s386, 0
      %p389 = scmp.lt.s32.totalorder %s24, 1
      %s390 = scalar_select %p389, %s24, 1
      %p391 = scmp.lt.s32.totalorder %s388, 0
      %s392 = scalar_select %p391, %s388, 0
      %s393 = smul.addr %s390, 4
      %s394 = sadd.s32 %s392, %s393
      %s395 = smul.addr %s394, 8
      %s396 = scalar_lea.vmem %s1, %s395
      %p397 = pneg %p89
      %p398 = pneg %p86
      %s399 = sadd.s32 %s25, 1
      %p400 = scmp.lt.s32.totalorder %s399, 0
      %s401 = scalar_select %p400, %s399, 0
      %p402 = scmp.lt.s32.totalorder %s24, 1
      %s403 = scalar_select %p402, %s24, 1
      %p404 = scmp.lt.s32.totalorder %s401, 0
      %s405 = scalar_select %p404, %s401, 0
      %s406 = smul.addr %s403, 4
      %s407 = sadd.s32 %s405, %s406
      %s408 = smul.addr %s407, 8
      %s409 = scalar_lea.vmem %s2, %s408
      %p410 = pneg %p123
      %p411 = pneg %p120
      %p412 = scmp.lt.s32.totalorder %s24, 1
      %s413 = scalar_select %p412, %s24, 1
      %s414 = smul.addr %s413, 4
      %s415 = smul.addr %s414, 8
      %s416 = scalar_lea.vmem %s3, %s415
      %p417 = pneg %p149
      %p418 = pneg %p146
      %p419 = pneg %p170
      %p420 = pneg %p167
      %p421 = pneg %p191
      %p422 = pneg %p188
      %p423 = pneg %p212
      %p424 = pneg %p209
      %p425 = pneg %p233
      %p426 = pneg %p230
      %p427 = pneg %p254
      %p428 = pneg %p251
      %p429 = pneg %p282
      %p430 = pneg %p279
      %p431 = scmp.lt.s32.totalorder %s24, 1
      %s432 = scalar_select %p431, %s24, 1
      %p433 = scmp.lt.s32.totalorder %s25, 0
      %s434 = scalar_select %p433, %s25, 0
      %s435 = smul.addr %s432, 4
      %s436 = sadd.s32 %s434, %s435
      %s437 = smul.addr %s436, 8
      %s438 = scalar_lea.vmem %s9, %s437
      %p439 = scmp.lt.s32.totalorder %s24, 1
      %s440 = scalar_select %p439, %s24, 1
      %p441 = scmp.lt.s32.totalorder %s25, 0
      %s442 = scalar_select %p441, %s25, 0
      %s443 = smul.addr %s440, 4
      %s444 = sadd.s32 %s442, %s443
      %s445 = smul.addr %s444, 8
      %s446 = scalar_lea.vmem %s0, %s445
      %s447 = ssub.s32 %s25, 1
      %p448 = scmp.gt.s32.totalorder %s447, 0
      %s449 = scalar_select %p448, %s447, 0
      %p450 = scmp.lt.s32.totalorder %s24, 1
      %s451 = scalar_select %p450, %s24, 1
      %p452 = scmp.lt.s32.totalorder %s449, 0
      %s453 = scalar_select %p452, %s449, 0
      %s454 = smul.addr %s451, 4
      %s455 = sadd.s32 %s453, %s454
      %s456 = smul.addr %s455, 8
      %s457 = scalar_lea.vmem %s1, %s456
      %s458 = ssub.s32 %s25, 1
      %p459 = scmp.gt.s32.totalorder %s458, 0
      %s460 = scalar_select %p459, %s458, 0
      %s461 = sadd.s32 %s25, 1
      %p462 = scmp.lt.s32.totalorder %s461, 0
      %s463 = scalar_select %p462, %s461, 0
      %p464 = scmp.lt.s32.totalorder %s24, 1
      %s465 = scalar_select %p464, %s24, 1
      %p466 = scmp.lt.s32.totalorder %s463, 0
      %s467 = scalar_select %p466, %s463, 0
      %s468 = smul.addr %s465, 4
      %s469 = sadd.s32 %s467, %s468
      %s470 = smul.addr %s469, 8
      %s471 = scalar_lea.vmem %s2, %s470
      %s472 = sadd.s32 %s25, 1
      %p473 = scmp.lt.s32.totalorder %s472, 0
      %s474 = scalar_select %p473, %s472, 0
      %p475 = scmp.lt.s32.totalorder %s24, 1
      %s476 = scalar_select %p475, %s24, 1
      %s477 = smul.addr %s476, 4
      %s478 = smul.addr %s477, 8
      %s479 = scalar_lea.vmem %s3, %s478
      %p480 = scmp.lt.s32.totalorder %s24, 1
      %s481 = scalar_select %p480, %s24, 1
      %p482 = scmp.lt.s32.totalorder %s25, 0
      %s483 = scalar_select %p482, %s25, 0
      %s484 = smul.addr %s481, 4
      %s485 = sadd.s32 %s483, %s484
      %s486 = smul.addr %s485, 8
      %s487 = scalar_lea.vmem %s9, %s486
      %v488 = vld [vmem:[%s446] sm:$0xff]
      %v489 = vld [vmem:[%s446 + $0x8] sm:$0xff]
      %v490 = vld [vmem:[%s446 + $0x10] sm:$0xff]
      %v491 = vld [vmem:[%s446 + $0x18] sm:$0xff]
      %vm492 = vcmp.ge.f32.partialorder %v488, 0.0
      %vm493 = vcmp.ge.f32.partialorder %v489, 0.0
      %vm494 = vcmp.ge.f32.partialorder %v490, 0.0
      %vm495 = vcmp.ge.f32.partialorder %v491, 0.0
      %v496 = vmul.f32 %v488, 0.2
      %v497 = vmul.f32 %v489, 0.2
      %v498 = vmul.f32 %v490, 0.2
      %v499 = vmul.f32 %v491, 0.2
      %v500 = vsel %vm492, %v488, %v496
      %v501 = vsel %vm493, %v489, %v497
      %v502 = vsel %vm494, %v490, %v498
      %v503 = vsel %vm495, %v491, %v499
      %504 = vst [vmem:[#allocation2 + $0x8] sm:$0xff] %v500
      %505 = vst [vmem:[#allocation2 + $0x20] sm:$0xff] %v501
      %506 = vst [vmem:[#allocation2 + $0x38] sm:$0xff] %v502
      %507 = vst [vmem:[#allocation2 + $0x50] sm:$0xff] %v503
      %v508 = vld [vmem:[%s457] sm:$0xff]
      %v509 = vld [vmem:[%s457 + $0x8] sm:$0xff]
      %v510 = vld [vmem:[%s457 + $0x10] sm:$0xff]
      %v511 = vld [vmem:[%s457 + $0x18] sm:$0xff]
      %vm512 = vcmp.ge.f32.partialorder %v508, 0.0
      %vm513 = vcmp.ge.f32.partialorder %v509, 0.0
      %vm514 = vcmp.ge.f32.partialorder %v510, 0.0
      %vm515 = vcmp.ge.f32.partialorder %v511, 0.0
      %v516 = vmul.f32 %v508, 0.2
      %v517 = vmul.f32 %v509, 0.2
      %v518 = vmul.f32 %v510, 0.2
      %v519 = vmul.f32 %v511, 0.2
      %v520 = vsel %vm512, %v508, %v516
      %v521 = vsel %vm513, %v509, %v517
      %v522 = vsel %vm514, %v510, %v518
      %v523 = vsel %vm515, %v511, %v519
      %524 = vst [vmem:[#allocation2] sm:$0xff] %v520
      %525 = vst [vmem:[#allocation2 + $0x18] sm:$0xff] %v521
      %526 = vst [vmem:[#allocation2 + $0x30] sm:$0xff] %v522
      %527 = vst [vmem:[#allocation2 + $0x48] sm:$0xff] %v523
      %v528 = vld [vmem:[%s471] sm:$0xff]
      %v529 = vld [vmem:[%s471 + $0x8] sm:$0xff]
      %v530 = vld [vmem:[%s471 + $0x10] sm:$0xff]
      %v531 = vld [vmem:[%s471 + $0x18] sm:$0xff]
      %vm532 = vcmp.ge.f32.partialorder %v528, 0.0
      %vm533 = vcmp.ge.f32.partialorder %v529, 0.0
      %vm534 = vcmp.ge.f32.partialorder %v530, 0.0
      %vm535 = vcmp.ge.f32.partialorder %v531, 0.0
      %v536 = vmul.f32 %v528, 0.2
      %v537 = vmul.f32 %v529, 0.2
      %v538 = vmul.f32 %v530, 0.2
      %v539 = vmul.f32 %v531, 0.2
      %v540 = vsel %vm532, %v528, %v536
      %v541 = vsel %vm533, %v529, %v537
      %v542 = vsel %vm534, %v530, %v538
      %v543 = vsel %vm535, %v531, %v539
      %544 = vst [vmem:[#allocation2 + $0x10] sm:$0xff] %v540
      %545 = vst [vmem:[#allocation2 + $0x28] sm:$0xff] %v541
      %546 = vst [vmem:[#allocation2 + $0x40] sm:$0xff] %v542
      %547 = vst [vmem:[#allocation2 + $0x58] sm:$0xff] %v543
      %v548 = vld [vmem:[%s479] sm:$0xff]
      %v549 = vld [vmem:[%s479 + $0x8] sm:$0xff]
      %v550 = vld [vmem:[%s479 + $0x10] sm:$0xff]
      %v551 = vld [vmem:[%s479 + $0x18] sm:$0xff]
      %vm552 = vcmp.ge.f32.partialorder %v548, 0.0
      %vm553 = vcmp.ge.f32.partialorder %v549, 0.0
      %vm554 = vcmp.ge.f32.partialorder %v550, 0.0
      %vm555 = vcmp.ge.f32.partialorder %v551, 0.0
      %v556 = vmul.f32 %v548, 0.2
      %v557 = vmul.f32 %v549, 0.2
      %v558 = vmul.f32 %v550, 0.2
      %v559 = vmul.f32 %v551, 0.2
      %v560 = vsel %vm552, %v548, %v556
      %v561 = vsel %vm553, %v549, %v557
      %v562 = vsel %vm554, %v550, %v558
      %v563 = vsel %vm555, %v551, %v559
      %p564 = scmp.eq.s32.totalorder %s25, 0
      // Predicated region
      $region57: #{tpu_custom_call.1} parent=55 // pred_check
        %p565 = pneg %p564
      $region58: #{tpu_custom_call.1} parent=55 // pred_check_branch
        %567 = sbr.rel (%p565) target = $region60
      $region59: #{tpu_custom_call.1} parent=55 // pred_region
        %572 = vrot.lane.b32.xlu0 %v560, 127
        %v573 = vpop.permute.xlu0 %572
        %574 = vrot.lane.b32.xlu0 %v561, 127
        %v575 = vpop.permute.xlu0 %574
        %576 = vrot.lane.b32.xlu0 %v562, 127
        %v577 = vpop.permute.xlu0 %576
        %578 = vrot.lane.b32.xlu0 %v563, 127
        %v579 = vpop.permute.xlu0 %578
        %vm584 = vcmask 1048568
        %585 = vst.msk [vmem:[#allocation2] sm:$0xff] %vm584, %v573
        %586 = vst.msk [vmem:[#allocation2 + $0x18] sm:$0xff] %vm584, %v575
        %587 = vst.msk [vmem:[#allocation2 + $0x30] sm:$0xff] %vm584, %v577
        %588 = vst.msk [vmem:[#allocation2 + $0x48] sm:$0xff] %vm584, %v579
        %589 = vrot.lane.b32.xlu0 %v560, 15
        %v590 = vpop.permute.xlu0 %589
        %591 = vrot.lane.b32.xlu0 %v561, 15
        %v592 = vpop.permute.xlu0 %591
        %593 = vrot.lane.b32.xlu0 %v562, 15
        %v594 = vpop.permute.xlu0 %593
        %595 = vrot.lane.b32.xlu0 %v563, 15
        %v596 = vpop.permute.xlu0 %595
        %vm601 = vcmask 138368
        %602 = vst.msk [vmem:[#allocation2 + $0x8] sm:$0xff] %vm601, %v590
        %603 = vst.msk [vmem:[#allocation2 + $0x20] sm:$0xff] %vm601, %v592
        %604 = vst.msk [vmem:[#allocation2 + $0x38] sm:$0xff] %vm601, %v594
        %605 = vst.msk [vmem:[#allocation2 + $0x50] sm:$0xff] %vm601, %v596
      $region60: #{tpu_custom_call.1} parent=55 // pred_fallthru
        _
      %v606 = vld [vmem:[#allocation2] sm:$0xff]
      %v607 = vld [vmem:[#allocation2 + $0x8] sm:$0xff]
      %v608 = vld [vmem:[#allocation2 + $0x10] sm:$0xff]
      %v609 = vld [vmem:[#allocation2 + $0x18] sm:$0xff]
      %v610 = vld [vmem:[#allocation2 + $0x20] sm:$0xff]
      %v611 = vld [vmem:[#allocation2 + $0x28] sm:$0xff]
      %v612 = vld [vmem:[#allocation2 + $0x30] sm:$0xff]
      %v613 = vld [vmem:[#allocation2 + $0x38] sm:$0xff]
      %v614 = vld [vmem:[#allocation2 + $0x40] sm:$0xff]
      %v615 = vld [vmem:[#allocation2 + $0x48] sm:$0xff]
      %v616 = vld [vmem:[#allocation2 + $0x50] sm:$0xff]
      %v617 = vld [vmem:[#allocation2 + $0x58] sm:$0xff]
      %v618 = vld [vmem:[%s4] sm:$0xff]
      %v619 = vld [vmem:[%s4 + $0x8] sm:$0xff]
      %v620 = vld [vmem:[%s4 + $0x10] sm:$0xff]
      %v621 = vld [vmem:[%s4 + $0x18] sm:$0xff]
      %s622 = scalar_lea.vmem %s4, 32
      %v623 = vld [vmem:[%s622] sm:$0xff]
      %v624 = vld [vmem:[%s622 + $0x8] sm:$0xff]
      %v625 = vld [vmem:[%s622 + $0x10] sm:$0xff]
      %v626 = vld [vmem:[%s622 + $0x18] sm:$0xff]
      %vm627 = vcmask 261120
      %v629 = vsel %vm627, %v623, 0
      %v632 = vsel %vm627, %v624, 0
      %v635 = vsel %vm627, %v625, 0
      %v638 = vsel %vm627, %v626, 0
      %640 = vmatprep.subr.mxu0 0.0
      %641 = vmatpush1.msra.mxu0 0.0
      %642 = vmatprep.subr.mxu0 0.0
      %643 = vmatpush1.msra.mxu0 0.0
      %644 = vmatprep.subr.mxu0 0.0
      %645 = vmatpush1.msra.mxu0 0.0
      %646 = vmatprep.subr.mxu0 0.0
      %647 = vmatpush1.msra.mxu0 0.0
      %648 = vmatprep.subr.mxu0 0.0
      %649 = vmatpush1.msra.mxu0 0.0
      %650 = vmatprep.subr.mxu0 0.0
      %651 = vmatpush1.msra.mxu0 0.0
      %652 = vmatprep.subr.mxu0 0.0
      %653 = vmatpush1.msra.mxu0 0.0
      %654 = vmatprep.subr.mxu0 0.0
      %655 = vmatpush1.msra.mxu0 0.0
      %656 = vmatprep.subr.mxu0 0.0
      %657 = vmatpush1.msra.mxu0 0.0
      %658 = vmatprep.subr.mxu0 0.0
      %659 = vmatpush1.msra.mxu0 0.0
      %660 = vmatprep.subr.mxu0 0.0
      %661 = vmatpush1.msra.mxu0 0.0
      %662 = vmatprep.subr.mxu0 0.0
      %663 = vmatpush1.msra.mxu0 0.0
      %664 = vmatprep.subr.mxu0 0.0
      %665 = vmatpush1.msra.mxu0 %v616
      %666 = vmatprep.subr.mxu0 0.0
      %667 = vmatpush1.msra.mxu0 %v613
      %668 = vmatprep.subr.mxu0 0.0
      %669 = vmatpush1.msra.mxu0 %v610
      %670 = vmatprep.subr.mxu0 0.0
      %671 = vmatpush1.msra.mxu0 %v607
      %672 = vmatprep.subr.mxu0 0.0
      %673 = vmatpush2.msra.mxu0 0.0
      %674 = vmatprep.subr.mxu0 0.0
      %675 = vmatpush2.msra.mxu0 0.0
      %676 = vmatprep.subr.mxu0 0.0
      %677 = vmatpush2.msra.mxu0 0.0
      %678 = vmatprep.subr.mxu0 0.0
      %679 = vmatpush2.msra.mxu0 0.0
      %680 = vmatprep.subr.mxu0 0.0
      %681 = vmatpush2.msra.mxu0 0.0
      %682 = vmatprep.subr.mxu0 0.0
      %683 = vmatpush2.msra.mxu0 0.0
      %684 = vmatprep.subr.mxu0 0.0
      %685 = vmatpush2.msra.mxu0 0.0
      %686 = vmatprep.subr.mxu0 0.0
      %687 = vmatpush2.msra.mxu0 0.0
      %688 = vmatprep.subr.mxu0 0.0
      %689 = vmatpush2.msra.mxu0 0.0
      %690 = vmatprep.subr.mxu0 0.0
      %691 = vmatpush2.msra.mxu0 0.0
      %692 = vmatprep.subr.mxu0 0.0
      %693 = vmatpush2.msra.mxu0 0.0
      %694 = vmatprep.subr.mxu0 0.0
      %695 = vmatpush2.msra.mxu0 0.0
      %696 = vmatprep.subr.mxu0 0.0
      %697 = vmatpush2.msra.mxu0 0.0
      %698 = vmatprep.subr.mxu0 0.0
      %699 = vmatpush2.msra.mxu0 0.0
      %700 = vmatprep.subr.mxu0 0.0
      %701 = vmatpush2.msra.mxu0 0.0
      %702 = vmatprep.subr.mxu0 0.0
      %703 = vmatpush2.msra.mxu0 0.0
      %704 = vmatprep.mubr.f32.mxu0 0.0
      %705 = vmatmul.mubr.f32.gmra.mxu0 %v629
      %v706 = vpop.f32.mrf.mxu0
      %v707 = vadd.f32 0.0, %v706
      %v708 = vpop.f32.mrf.mxu0
      %709 = vmatprep.mubr.f32.mxu0 0.0
      %710 = vmatmul.mubr.f32.gmra.mxu0 %v632
      %v711 = vpop.f32.mrf.mxu0
      %v712 = vadd.f32 0.0, %v711
      %v713 = vpop.f32.mrf.mxu0
      %714 = vmatprep.mubr.f32.mxu0 0.0
      %715 = vmatmul.mubr.f32.gmra.mxu0 %v635
      %v716 = vpop.f32.mrf.mxu0
      %v717 = vadd.f32 0.0, %v716
      %v718 = vpop.f32.mrf.mxu0
      %719 = vmatprep.mubr.f32.mxu0 0.0
      %720 = vmatmul.mubr.f32.gmra.mxu0 %v638
      %v721 = vpop.f32.mrf.mxu0
      %v722 = vadd.f32 0.0, %v721
      %v723 = vpop.f32.mrf.mxu0
      %724 = vdwg.mxu0
      %733 = vrot.lane.b32.xlu0 %v606, 1
      %v734 = vpop.permute.xlu0 %733
      %735 = vrot.lane.b32.xlu0 %v607, 1
      %v736 = vpop.permute.xlu0 %735
      %737 = vrot.lane.b32.xlu0 %v609, 1
      %v738 = vpop.permute.xlu0 %737
      %739 = vrot.lane.b32.xlu0 %v610, 1
      %v740 = vpop.permute.xlu0 %739
      %741 = vrot.lane.b32.xlu0 %v612, 1
      %v742 = vpop.permute.xlu0 %741
      %743 = vrot.lane.b32.xlu0 %v613, 1
      %v744 = vpop.permute.xlu0 %743
      %745 = vrot.lane.b32.xlu0 %v615, 1
      %v746 = vpop.permute.xlu0 %745
      %747 = vrot.lane.b32.xlu0 %v616, 1
      %v748 = vpop.permute.xlu0 %747
      %vm749 = vcmask 7168
      %v750 = vsel %vm749, %v734, %v736
      %v751 = vsel %vm749, %v738, %v740
      %v752 = vsel %vm749, %v742, %v744
      %v753 = vsel %vm749, %v746, %v748
      %v759 = vsel %vm627, %v618, 0
      %v762 = vsel %vm627, %v619, 0
      %v765 = vsel %vm627, %v620, 0
      %v768 = vsel %vm627, %v621, 0
      %770 = vmatprep.subr.mxu0 0.0
      %771 = vmatpush1.msra.mxu0 0.0
      %772 = vmatprep.subr.mxu0 0.0
      %773 = vmatpush1.msra.mxu0 0.0
      %774 = vmatprep.subr.mxu0 0.0
      %775 = vmatpush1.msra.mxu0 0.0
      %776 = vmatprep.subr.mxu0 0.0
      %777 = vmatpush1.msra.mxu0 0.0
      %778 = vmatprep.subr.mxu0 0.0
      %779 = vmatpush1.msra.mxu0 0.0
      %780 = vmatprep.subr.mxu0 0.0
      %781 = vmatpush1.msra.mxu0 0.0
      %782 = vmatprep.subr.mxu0 0.0
      %783 = vmatpush1.msra.mxu0 0.0
      %784 = vmatprep.subr.mxu0 0.0
      %785 = vmatpush1.msra.mxu0 0.0
      %786 = vmatprep.subr.mxu0 0.0
      %787 = vmatpush1.msra.mxu0 0.0
      %788 = vmatprep.subr.mxu0 0.0
      %789 = vmatpush1.msra.mxu0 0.0
      %790 = vmatprep.subr.mxu0 0.0
      %791 = vmatpush1.msra.mxu0 0.0
      %792 = vmatprep.subr.mxu0 0.0
      %793 = vmatpush1.msra.mxu0 0.0
      %794 = vmatprep.subr.mxu0 0.0
      %795 = vmatpush1.msra.mxu0 %v753
      %796 = vmatprep.subr.mxu0 0.0
      %797 = vmatpush1.msra.mxu0 %v752
      %798 = vmatprep.subr.mxu0 0.0
      %799 = vmatpush1.msra.mxu0 %v751
      %800 = vmatprep.subr.mxu0 0.0
      %801 = vmatpush1.msra.mxu0 %v750
      %802 = vmatprep.subr.mxu0 0.0
      %803 = vmatpush2.msra.mxu0 0.0
      %804 = vmatprep.subr.mxu0 0.0
      %805 = vmatpush2.msra.mxu0 0.0
      %806 = vmatprep.subr.mxu0 0.0
      %807 = vmatpush2.msra.mxu0 0.0
      %808 = vmatprep.subr.mxu0 0.0
      %809 = vmatpush2.msra.mxu0 0.0
      %810 = vmatprep.subr.mxu0 0.0
      %811 = vmatpush2.msra.mxu0 0.0
      %812 = vmatprep.subr.mxu0 0.0
      %813 = vmatpush2.msra.mxu0 0.0
      %814 = vmatprep.subr.mxu0 0.0
      %815 = vmatpush2.msra.mxu0 0.0
      %816 = vmatprep.subr.mxu0 0.0
      %817 = vmatpush2.msra.mxu0 0.0
      %818 = vmatprep.subr.mxu0 0.0
      %819 = vmatpush2.msra.mxu0 0.0
      %820 = vmatprep.subr.mxu0 0.0
      %821 = vmatpush2.msra.mxu0 0.0
      %822 = vmatprep.subr.mxu0 0.0
      %823 = vmatpush2.msra.mxu0 0.0
      %824 = vmatprep.subr.mxu0 0.0
      %825 = vmatpush2.msra.mxu0 0.0
      %826 = vmatprep.subr.mxu0 0.0
      %827 = vmatpush2.msra.mxu0 0.0
      %828 = vmatprep.subr.mxu0 0.0
      %829 = vmatpush2.msra.mxu0 0.0
      %830 = vmatprep.subr.mxu0 0.0
      %831 = vmatpush2.msra.mxu0 0.0
      %832 = vmatprep.subr.mxu0 0.0
      %833 = vmatpush2.msra.mxu0 0.0
      %834 = vmatprep.mubr.f32.mxu0 0.0
      %835 = vmatmul.mubr.f32.gmra.mxu0 %v759
      %v836 = vpop.f32.mrf.mxu0
      %v837 = vadd.f32 %v707, %v836
      %v838 = vpop.f32.mrf.mxu0
      %839 = vmatprep.mubr.f32.mxu0 0.0
      %840 = vmatmul.mubr.f32.gmra.mxu0 %v762
      %v841 = vpop.f32.mrf.mxu0
      %v842 = vadd.f32 %v712, %v841
      %v843 = vpop.f32.mrf.mxu0
      %844 = vmatprep.mubr.f32.mxu0 0.0
      %845 = vmatmul.mubr.f32.gmra.mxu0 %v765
      %v846 = vpop.f32.mrf.mxu0
      %v847 = vadd.f32 %v717, %v846
      %v848 = vpop.f32.mrf.mxu0
      %849 = vmatprep.mubr.f32.mxu0 0.0
      %850 = vmatmul.mubr.f32.gmra.mxu0 %v768
      %v851 = vpop.f32.mrf.mxu0
      %v852 = vadd.f32 %v722, %v851
      %v853 = vpop.f32.mrf.mxu0
      %854 = vdwg.mxu0
      %s855 = scalar_lea.vmem %s4, 64
      %v856 = vld [vmem:[%s855] sm:$0xff]
      %v857 = vld [vmem:[%s855 + $0x8] sm:$0xff]
      %v858 = vld [vmem:[%s855 + $0x10] sm:$0xff]
      %v859 = vld [vmem:[%s855 + $0x18] sm:$0xff]
      %864 = vrot.lane.b32.xlu0 %v607, 127
      %v865 = vpop.permute.xlu0 %864
      %866 = vrot.lane.b32.xlu0 %v608, 127
      %v867 = vpop.permute.xlu0 %866
      %868 = vrot.lane.b32.xlu0 %v610, 127
      %v869 = vpop.permute.xlu0 %868
      %870 = vrot.lane.b32.xlu0 %v611, 127
      %v871 = vpop.permute.xlu0 %870
      %872 = vrot.lane.b32.xlu0 %v613, 127
      %v873 = vpop.permute.xlu0 %872
      %874 = vrot.lane.b32.xlu0 %v614, 127
      %v875 = vpop.permute.xlu0 %874
      %876 = vrot.lane.b32.xlu0 %v616, 127
      %v877 = vpop.permute.xlu0 %876
      %878 = vrot.lane.b32.xlu0 %v617, 127
      %v879 = vpop.permute.xlu0 %878
      %vm880 = vcmask 1039360
      %v881 = vsel %vm880, %v865, %v867
      %v882 = vsel %vm880, %v869, %v871
      %v883 = vsel %vm880, %v873, %v875
      %v884 = vsel %vm880, %v877, %v879
      %v890 = vsel %vm627, %v856, 0
      %v893 = vsel %vm627, %v857, 0
      %v896 = vsel %vm627, %v858, 0
      %v899 = vsel %vm627, %v859, 0
      %901 = vmatprep.subr.mxu0 0.0
      %902 = vmatpush1.msra.mxu0 0.0
      %903 = vmatprep.subr.mxu0 0.0
      %904 = vmatpush1.msra.mxu0 0.0
      %905 = vmatprep.subr.mxu0 0.0
      %906 = vmatpush1.msra.mxu0 0.0
      %907 = vmatprep.subr.mxu0 0.0
      %908 = vmatpush1.msra.mxu0 0.0
      %909 = vmatprep.subr.mxu0 0.0
      %910 = vmatpush1.msra.mxu0 0.0
      %911 = vmatprep.subr.mxu0 0.0
      %912 = vmatpush1.msra.mxu0 0.0
      %913 = vmatprep.subr.mxu0 0.0
      %914 = vmatpush1.msra.mxu0 0.0
      %915 = vmatprep.subr.mxu0 0.0
      %916 = vmatpush1.msra.mxu0 0.0
      %917 = vmatprep.subr.mxu0 0.0
      %918 = vmatpush1.msra.mxu0 0.0
      %919 = vmatprep.subr.mxu0 0.0
      %920 = vmatpush1.msra.mxu0 0.0
      %921 = vmatprep.subr.mxu0 0.0
      %922 = vmatpush1.msra.mxu0 0.0
      %923 = vmatprep.subr.mxu0 0.0
      %924 = vmatpush1.msra.mxu0 0.0
      %925 = vmatprep.subr.mxu0 0.0
      %926 = vmatpush1.msra.mxu0 %v884
      %927 = vmatprep.subr.mxu0 0.0
      %928 = vmatpush1.msra.mxu0 %v883
      %929 = vmatprep.subr.mxu0 0.0
      %930 = vmatpush1.msra.mxu0 %v882
      %931 = vmatprep.subr.mxu0 0.0
      %932 = vmatpush1.msra.mxu0 %v881
      %933 = vmatprep.subr.mxu0 0.0
      %934 = vmatpush2.msra.mxu0 0.0
      %935 = vmatprep.subr.mxu0 0.0
      %936 = vmatpush2.msra.mxu0 0.0
      %937 = vmatprep.subr.mxu0 0.0
      %938 = vmatpush2.msra.mxu0 0.0
      %939 = vmatprep.subr.mxu0 0.0
      %940 = vmatpush2.msra.mxu0 0.0
      %941 = vmatprep.subr.mxu0 0.0
      %942 = vmatpush2.msra.mxu0 0.0
      %943 = vmatprep.subr.mxu0 0.0
      %944 = vmatpush2.msra.mxu0 0.0
      %945 = vmatprep.subr.mxu0 0.0
      %946 = vmatpush2.msra.mxu0 0.0
      %947 = vmatprep.subr.mxu0 0.0
      %948 = vmatpush2.msra.mxu0 0.0
      %949 = vmatprep.subr.mxu0 0.0
      %950 = vmatpush2.msra.mxu0 0.0
      %951 = vmatprep.subr.mxu0 0.0
      %952 = vmatpush2.msra.mxu0 0.0
      %953 = vmatprep.subr.mxu0 0.0
      %954 = vmatpush2.msra.mxu0 0.0
      %955 = vmatprep.subr.mxu0 0.0
      %956 = vmatpush2.msra.mxu0 0.0
      %957 = vmatprep.subr.mxu0 0.0
      %958 = vmatpush2.msra.mxu0 0.0
      %959 = vmatprep.subr.mxu0 0.0
      %960 = vmatpush2.msra.mxu0 0.0
      %961 = vmatprep.subr.mxu0 0.0
      %962 = vmatpush2.msra.mxu0 0.0
      %963 = vmatprep.subr.mxu0 0.0
      %964 = vmatpush2.msra.mxu0 0.0
      %965 = vmatprep.mubr.f32.mxu0 0.0
      %966 = vmatmul.mubr.f32.gmra.mxu0 %v890
      %v967 = vpop.f32.mrf.mxu0
      %v968 = vadd.f32 0.0, %v967
      %v969 = vpop.f32.mrf.mxu0
      %970 = vmatprep.mubr.f32.mxu0 0.0
      %971 = vmatmul.mubr.f32.gmra.mxu0 %v893
      %v972 = vpop.f32.mrf.mxu0
      %v973 = vadd.f32 0.0, %v972
      %v974 = vpop.f32.mrf.mxu0
      %975 = vmatprep.mubr.f32.mxu0 0.0
      %976 = vmatmul.mubr.f32.gmra.mxu0 %v896
      %v977 = vpop.f32.mrf.mxu0
      %v978 = vadd.f32 0.0, %v977
      %v979 = vpop.f32.mrf.mxu0
      %980 = vmatprep.mubr.f32.mxu0 0.0
      %981 = vmatmul.mubr.f32.gmra.mxu0 %v899
      %v982 = vpop.f32.mrf.mxu0
      %v983 = vadd.f32 0.0, %v982
      %v984 = vpop.f32.mrf.mxu0
      %985 = vdwg.mxu0
      %v986 = vadd.f32 %v837, %v968
      %v987 = vadd.f32 %v842, %v973
      %v988 = vadd.f32 %v847, %v978
      %v989 = vadd.f32 %v852, %v983
      %v990 = vld [vmem:[%s5] sm:$0xff]
      %v991 = vld [vmem:[%s5 + $0x8] sm:$0xff]
      %v992 = vld [vmem:[%s5 + $0x10] sm:$0xff]
      %v993 = vld [vmem:[%s5 + $0x18] sm:$0xff]
      %995 = vset.pattern.permute.xlu0 0
      %996 = vperm.xlu0 %995, %v990
      %v997 = vpop.permute.xlu0 %996
      %1000 = vset.pattern.permute.xlu0 0
      %1001 = vperm.xlu0 %1000, %v991
      %v1002 = vpop.permute.xlu0 %1001
      %1005 = vset.pattern.permute.xlu0 0
      %1006 = vperm.xlu0 %1005, %v992
      %v1007 = vpop.permute.xlu0 %1006
      %1010 = vset.pattern.permute.xlu0 0
      %1011 = vperm.xlu0 %1010, %v993
      %v1012 = vpop.permute.xlu0 %1011
      %v1014 = vadd.f32 %v986, %v997
      %v1015 = vadd.f32 %v987, %v1002
      %v1016 = vadd.f32 %v988, %v1007
      %v1017 = vadd.f32 %v989, %v1012
      %vm1018 = vcmp.ge.f32.partialorder %v1014, 0.0
      %vm1019 = vcmp.ge.f32.partialorder %v1015, 0.0
      %vm1020 = vcmp.ge.f32.partialorder %v1016, 0.0
      %vm1021 = vcmp.ge.f32.partialorder %v1017, 0.0
      %v1022 = vmul.f32 %v1014, 0.2
      %v1023 = vmul.f32 %v1015, 0.2
      %v1024 = vmul.f32 %v1016, 0.2
      %v1025 = vmul.f32 %v1017, 0.2
      %v1026 = vsel %vm1018, %v1014, %v1022
      %v1027 = vsel %vm1019, %v1015, %v1023
      %v1028 = vsel %vm1020, %v1016, %v1024
      %v1029 = vsel %vm1021, %v1017, %v1025
      %v1030 = vld [vmem:[%s6] sm:$0xff]
      %v1031 = vld [vmem:[%s6 + $0x8] sm:$0xff]
      %v1032 = vld [vmem:[%s6 + $0x10] sm:$0xff]
      %v1033 = vld [vmem:[%s6 + $0x18] sm:$0xff]
      %v1034 = vld [vmem:[%s7] sm:$0xff]
      %v1035 = vld [vmem:[%s7 + $0x8] sm:$0xff]
      %v1036 = vld [vmem:[%s7 + $0x10] sm:$0xff]
      %v1037 = vld [vmem:[%s7 + $0x18] sm:$0xff]
      %v1039 = vsel %vm627, %v1034, 0
      %v1042 = vsel %vm627, %v1035, 0
      %v1045 = vsel %vm627, %v1036, 0
      %v1048 = vsel %vm627, %v1037, 0
      %1050 = vmatprep.subr.mxu0 0.0
      %1051 = vmatpush1.msra.mxu0 0.0
      %1052 = vmatprep.subr.mxu0 0.0
      %1053 = vmatpush1.msra.mxu0 0.0
      %1054 = vmatprep.subr.mxu0 0.0
      %1055 = vmatpush1.msra.mxu0 0.0
      %1056 = vmatprep.subr.mxu0 0.0
      %1057 = vmatpush1.msra.mxu0 0.0
      %1058 = vmatprep.subr.mxu0 0.0
      %1059 = vmatpush1.msra.mxu0 0.0
      %1060 = vmatprep.subr.mxu0 0.0
      %1061 = vmatpush1.msra.mxu0 0.0
      %1062 = vmatprep.subr.mxu0 0.0
      %1063 = vmatpush1.msra.mxu0 0.0
      %1064 = vmatprep.subr.mxu0 0.0
      %1065 = vmatpush1.msra.mxu0 0.0
      %1066 = vmatprep.subr.mxu0 0.0
      %1067 = vmatpush1.msra.mxu0 0.0
      %1068 = vmatprep.subr.mxu0 0.0
      %1069 = vmatpush1.msra.mxu0 0.0
      %1070 = vmatprep.subr.mxu0 0.0
      %1071 = vmatpush1.msra.mxu0 0.0
      %1072 = vmatprep.subr.mxu0 0.0
      %1073 = vmatpush1.msra.mxu0 0.0
      %1074 = vmatprep.subr.mxu0 0.0
      %1075 = vmatpush1.msra.mxu0 %v491
      %1076 = vmatprep.subr.mxu0 0.0
      %1077 = vmatpush1.msra.mxu0 %v490
      %1078 = vmatprep.subr.mxu0 0.0
      %1079 = vmatpush1.msra.mxu0 %v489
      %1080 = vmatprep.subr.mxu0 0.0
      %1081 = vmatpush1.msra.mxu0 %v488
      %1082 = vmatprep.subr.mxu0 0.0
      %1083 = vmatpush2.msra.mxu0 0.0
      %1084 = vmatprep.subr.mxu0 0.0
      %1085 = vmatpush2.msra.mxu0 0.0
      %1086 = vmatprep.subr.mxu0 0.0
      %1087 = vmatpush2.msra.mxu0 0.0
      %1088 = vmatprep.subr.mxu0 0.0
      %1089 = vmatpush2.msra.mxu0 0.0
      %1090 = vmatprep.subr.mxu0 0.0
      %1091 = vmatpush2.msra.mxu0 0.0
      %1092 = vmatprep.subr.mxu0 0.0
      %1093 = vmatpush2.msra.mxu0 0.0
      %1094 = vmatprep.subr.mxu0 0.0
      %1095 = vmatpush2.msra.mxu0 0.0
      %1096 = vmatprep.subr.mxu0 0.0
      %1097 = vmatpush2.msra.mxu0 0.0
      %1098 = vmatprep.subr.mxu0 0.0
      %1099 = vmatpush2.msra.mxu0 0.0
      %1100 = vmatprep.subr.mxu0 0.0
      %1101 = vmatpush2.msra.mxu0 0.0
      %1102 = vmatprep.subr.mxu0 0.0
      %1103 = vmatpush2.msra.mxu0 0.0
      %1104 = vmatprep.subr.mxu0 0.0
      %1105 = vmatpush2.msra.mxu0 0.0
      %1106 = vmatprep.subr.mxu0 0.0
      %1107 = vmatpush2.msra.mxu0 0.0
      %1108 = vmatprep.subr.mxu0 0.0
      %1109 = vmatpush2.msra.mxu0 0.0
      %1110 = vmatprep.subr.mxu0 0.0
      %1111 = vmatpush2.msra.mxu0 0.0
      %1112 = vmatprep.subr.mxu0 0.0
      %1113 = vmatpush2.msra.mxu0 0.0
      %1114 = vmatprep.mubr.f32.mxu0 0.0
      %1115 = vmatmul.mubr.f32.gmra.mxu0 %v1039
      %v1116 = vpop.f32.mrf.mxu0
      %v1117 = vadd.f32 0.0, %v1116
      %v1118 = vpop.f32.mrf.mxu0
      %1119 = vmatprep.mubr.f32.mxu0 0.0
      %1120 = vmatmul.mubr.f32.gmra.mxu0 %v1042
      %v1121 = vpop.f32.mrf.mxu0
      %v1122 = vadd.f32 0.0, %v1121
      %v1123 = vpop.f32.mrf.mxu0
      %1124 = vmatprep.mubr.f32.mxu0 0.0
      %1125 = vmatmul.mubr.f32.gmra.mxu0 %v1045
      %v1126 = vpop.f32.mrf.mxu0
      %v1127 = vadd.f32 0.0, %v1126
      %v1128 = vpop.f32.mrf.mxu0
      %1129 = vmatprep.mubr.f32.mxu0 0.0
      %1130 = vmatmul.mubr.f32.gmra.mxu0 %v1048
      %v1131 = vpop.f32.mrf.mxu0
      %v1132 = vadd.f32 0.0, %v1131
      %v1133 = vpop.f32.mrf.mxu0
      %1134 = vdwg.mxu0
      %v1136 = vsel %vm627, %v1030, 0
      %v1139 = vsel %vm627, %v1031, 0
      %v1142 = vsel %vm627, %v1032, 0
      %v1145 = vsel %vm627, %v1033, 0
      %1147 = vmatprep.subr.mxu0 0.0
      %1148 = vmatpush1.msra.mxu0 0.0
      %1149 = vmatprep.subr.mxu0 0.0
      %1150 = vmatpush1.msra.mxu0 0.0
      %1151 = vmatprep.subr.mxu0 0.0
      %1152 = vmatpush1.msra.mxu0 0.0
      %1153 = vmatprep.subr.mxu0 0.0
      %1154 = vmatpush1.msra.mxu0 0.0
      %1155 = vmatprep.subr.mxu0 0.0
      %1156 = vmatpush1.msra.mxu0 0.0
      %1157 = vmatprep.subr.mxu0 0.0
      %1158 = vmatpush1.msra.mxu0 0.0
      %1159 = vmatprep.subr.mxu0 0.0
      %1160 = vmatpush1.msra.mxu0 0.0
      %1161 = vmatprep.subr.mxu0 0.0
      %1162 = vmatpush1.msra.mxu0 0.0
      %1163 = vmatprep.subr.mxu0 0.0
      %1164 = vmatpush1.msra.mxu0 0.0
      %1165 = vmatprep.subr.mxu0 0.0
      %1166 = vmatpush1.msra.mxu0 0.0
      %1167 = vmatprep.subr.mxu0 0.0
      %1168 = vmatpush1.msra.mxu0 0.0
      %1169 = vmatprep.subr.mxu0 0.0
      %1170 = vmatpush1.msra.mxu0 0.0
      %1171 = vmatprep.subr.mxu0 0.0
      %1172 = vmatpush1.msra.mxu0 %v1029
      %1173 = vmatprep.subr.mxu0 0.0
      %1174 = vmatpush1.msra.mxu0 %v1028
      %1175 = vmatprep.subr.mxu0 0.0
      %1176 = vmatpush1.msra.mxu0 %v1027
      %1177 = vmatprep.subr.mxu0 0.0
      %1178 = vmatpush1.msra.mxu0 %v1026
      %1179 = vmatprep.subr.mxu0 0.0
      %1180 = vmatpush2.msra.mxu0 0.0
      %1181 = vmatprep.subr.mxu0 0.0
      %1182 = vmatpush2.msra.mxu0 0.0
      %1183 = vmatprep.subr.mxu0 0.0
      %1184 = vmatpush2.msra.mxu0 0.0
      %1185 = vmatprep.subr.mxu0 0.0
      %1186 = vmatpush2.msra.mxu0 0.0
      %1187 = vmatprep.subr.mxu0 0.0
      %1188 = vmatpush2.msra.mxu0 0.0
      %1189 = vmatprep.subr.mxu0 0.0
      %1190 = vmatpush2.msra.mxu0 0.0
      %1191 = vmatprep.subr.mxu0 0.0
      %1192 = vmatpush2.msra.mxu0 0.0
      %1193 = vmatprep.subr.mxu0 0.0
      %1194 = vmatpush2.msra.mxu0 0.0
      %1195 = vmatprep.subr.mxu0 0.0
      %1196 = vmatpush2.msra.mxu0 0.0
      %1197 = vmatprep.subr.mxu0 0.0
      %1198 = vmatpush2.msra.mxu0 0.0
      %1199 = vmatprep.subr.mxu0 0.0
      %1200 = vmatpush2.msra.mxu0 0.0
      %1201 = vmatprep.subr.mxu0 0.0
      %1202 = vmatpush2.msra.mxu0 0.0
      %1203 = vmatprep.subr.mxu0 0.0
      %1204 = vmatpush2.msra.mxu0 0.0
      %1205 = vmatprep.subr.mxu0 0.0
      %1206 = vmatpush2.msra.mxu0 0.0
      %1207 = vmatprep.subr.mxu0 0.0
      %1208 = vmatpush2.msra.mxu0 0.0
      %1209 = vmatprep.subr.mxu0 0.0
      %1210 = vmatpush2.msra.mxu0 0.0
      %1211 = vmatprep.mubr.f32.mxu0 0.0
      %1212 = vmatmul.mubr.f32.gmra.mxu0 %v1136
      %v1213 = vpop.f32.mrf.mxu0
      %v1214 = vadd.f32 %v1117, %v1213
      %v1215 = vpop.f32.mrf.mxu0
      %1216 = vmatprep.mubr.f32.mxu0 0.0
      %1217 = vmatmul.mubr.f32.gmra.mxu0 %v1139
      %v1218 = vpop.f32.mrf.mxu0
      %v1219 = vadd.f32 %v1122, %v1218
      %v1220 = vpop.f32.mrf.mxu0
      %1221 = vmatprep.mubr.f32.mxu0 0.0
      %1222 = vmatmul.mubr.f32.gmra.mxu0 %v1142
      %v1223 = vpop.f32.mrf.mxu0
      %v1224 = vadd.f32 %v1127, %v1223
      %v1225 = vpop.f32.mrf.mxu0
      %1226 = vmatprep.mubr.f32.mxu0 0.0
      %1227 = vmatmul.mubr.f32.gmra.mxu0 %v1145
      %v1228 = vpop.f32.mrf.mxu0
      %v1229 = vadd.f32 %v1132, %v1228
      %v1230 = vpop.f32.mrf.mxu0
      %1231 = vdwg.mxu0
      %v1232 = vld [vmem:[%s8] sm:$0xff]
      %v1233 = vld [vmem:[%s8 + $0x8] sm:$0xff]
      %v1234 = vld [vmem:[%s8 + $0x10] sm:$0xff]
      %v1235 = vld [vmem:[%s8 + $0x18] sm:$0xff]
      %1237 = vset.pattern.permute.xlu0 0
      %1238 = vperm.xlu0 %1237, %v1232
      %v1239 = vpop.permute.xlu0 %1238
      %1242 = vset.pattern.permute.xlu0 0
      %1243 = vperm.xlu0 %1242, %v1233
      %v1244 = vpop.permute.xlu0 %1243
      %1247 = vset.pattern.permute.xlu0 0
      %1248 = vperm.xlu0 %1247, %v1234
      %v1249 = vpop.permute.xlu0 %1248
      %1252 = vset.pattern.permute.xlu0 0
      %1253 = vperm.xlu0 %1252, %v1235
      %v1254 = vpop.permute.xlu0 %1253
      %v1256 = vadd.f32 %v1214, %v1239
      %v1257 = vadd.f32 %v1219, %v1244
      %v1258 = vadd.f32 %v1224, %v1249
      %v1259 = vadd.f32 %v1229, %v1254
      %1260 = vst [vmem:[%s487] sm:$0xff] %v1256
      %1261 = vst [vmem:[%s487 + $0x8] sm:$0xff] %v1257
      %1262 = vst [vmem:[%s487 + $0x10] sm:$0xff] %v1258
      %1263 = vst [vmem:[%s487 + $0x18] sm:$0xff] %v1259
      %p1264 = scmp.lt.s32.totalorder %s24, 1
      %s1265 = scalar_select %p1264, %s24, 1
      %p1266 = scmp.lt.s32.totalorder %s25, 0
      %s1267 = scalar_select %p1266, %s25, 0
      %s1268 = smul.addr %s1265, 4
      %s1269 = sadd.s32 %s1267, %s1268
      %s1270 = smul.addr %s1269, 8
      %s1271 = scalar_lea.vmem %s9, %s1270
      // Predicated region
      $region61: #{tpu_custom_call.1} parent=55 // pred_check
        %p1272 = pneg %p279
      $region62: #{tpu_custom_call.1} parent=55 // pred_check_branch
        %1274 = sbr.rel (%p1272) target = $region64
      $region63: #{tpu_custom_call.1} parent=55 // pred_region
        _
      $region64: #{tpu_custom_call.1} parent=55 // pred_fallthru
        _
    $region56: #{tpu_custom_call.1} parent=5 // pred_fallthru
      _
    %p1275 = scmp.le.s32.totalorder 2, %s15
    // Predicated region
    $region65: #{tpu_custom_call.1} parent=5 // pred_check
      %p1276 = pneg %p1275
    $region66: #{tpu_custom_call.1} parent=5 // pred_check_branch
      %1278 = sbr.rel (%p1276) target = $region68
    $region67: #{tpu_custom_call.1} parent=5 // pred_region
      %s1279 = ssub.s32 %s15, 2
      // Predicated region
      $region69: #{tpu_custom_call.1} parent=67 // pred_check
        %p1280 = pneg %p285
      $region70: #{tpu_custom_call.1} parent=67 // pred_check_branch
        %1282 = sbr.rel (%p1280) target = $region72
      $region71: #{tpu_custom_call.1} parent=67 // pred_region
        %p1283 = scmp.lt.s32.totalorder %s26, 1
        %s1284 = scalar_select %p1283, %s26, 1
        %p1285 = scmp.lt.s32.totalorder %s27, 0
        %s1286 = scalar_select %p1285, %s27, 0
        %s1287 = smul.addr %s1284, 4
        %s1288 = sadd.s32 %s1286, %s1287
        %s1289 = smul.addr %s1288, 8
        %s1290 = scalar_lea.vmem %s9, %s1289
      $region72: #{tpu_custom_call.1} parent=67 // pred_fallthru
        _
    $region68: #{tpu_custom_call.1} parent=5 // pred_fallthru
      _
  $region6: #{tpu_custom_call.1} parent=0 // loop_footer
    %s19 = sadd.s32 1, %s15
  $region7: #{tpu_custom_call.1} parent=0 // loop_footer_branch
    %14 = sbr.rel target = $region3
  $region8: #{tpu_custom_call.1} parent=0 // loop_exit
    _

</llo_original>
